<compile_context>
chip_gen: v5e
topology: v5e:2x2
jax: 0.10.0
libtpu: 0.0.40
codegen_flags: <defaults>
</compile_context>

<pallas_src>
import functools
import math

import jax
import jax.numpy as jnp
from jax.experimental import pallas as pl
from jax.experimental.pallas import tpu as pltpu

F32_NEG_MAX = -jnp.finfo(jnp.float32).max
LN_EPS = 1e-5
_SQRT_2_OVER_PI = 0.7978845608028654


# ----------------------------------------------------------------------------
# in-kernel helpers
# ----------------------------------------------------------------------------
def _layernorm(x, g, b):
    mean = jnp.mean(x, axis=-1, keepdims=True)
    var = jnp.mean((x - mean) ** 2, axis=-1, keepdims=True)
    return (x - mean) * jax.lax.rsqrt(var + LN_EPS) * g + b


def _gelu_tanh(x):
    # TODO(synk): torch nn.GELU() is the exact erf GELU; the tanh approximation
    # (|err| ~3e-4) is used so the transcendental runs on the otherwise-idle EUP.
    return 0.5 * x * (1.0 + jnp.tanh(_SQRT_2_OVER_PI * (x + 0.044715 * x * x * x)))


# ----------------------------------------------------------------------------
# fused ViT kernel: one (image, layer) grid step
# ----------------------------------------------------------------------------
def vit_kernel(patch_ref, pg_ref, pb_ref, pw_ref, pbias_ref, cls_ref, pos_ref,
               bn_g_ref, bn_b_ref,
               wqkv_ref, wo_ref, bo_ref, w1_ref, b1_ref, w2_ref, b2_ref,
               hg_ref, hb_ref, hw_ref, hbias_ref,
               out_ref, acc_ref, attn_ref,
               *, n_tok, heads, dim_head):
    """d == 0        : SPT-tail embed + cls token + pos-embedding prologue.
       every d       : bn -> LSA attention -> residual -> GELU FFN -> residual
                       (residual from bn(x), per the reference forward).
       d == depth-1  : cls pooling + mlp_head epilogue -> logits block."""
    d = pl.program_id(1)
    depth = pl.num_programs(1)
    inner = heads * dim_head
    n_pad = acc_ref.shape[0]                     # sublane-padded token count

    # ---------------- prologue: patch embedding (layer 0 only) --------------
    @pl.when(d == 0)
    def _():
        xn = _layernorm(patch_ref[...], pg_ref[...], pb_ref[...])
        tok = jnp.dot(xn, pw_ref[...], preferred_element_type=jnp.float32)
        tok = tok + pbias_ref[...]
        acc_ref[...] = jnp.zeros_like(acc_ref)               # zero the pad rows
        acc_ref[0:1, :] = cls_ref[...] + pos_ref[0:1, :]
        acc_ref[1:n_tok, :] = tok + pos_ref[1:n_tok, :]

    # ---------------- transformer layer d ------------------------------------
    x = acc_ref[...]                                          # resident (n_pad, dim)
    xn = _layernorm(x, bn_g_ref[...], bn_b_ref[...])

    # temperature (= dim_head**-0.5 at init) already folded into wqkv Q columns
    qkv = jnp.dot(xn, wqkv_ref[...], preferred_element_type=jnp.float32)

    row = jax.lax.broadcasted_iota(jnp.int32, (n_pad, n_pad), 0)
    col = jax.lax.broadcasted_iota(jnp.int32, (n_pad, n_pad), 1)
    mask = (row == col) | (col >= n_tok)          # LSA diagonal + pad-key mask

    for h in range(heads):
        c0 = h * dim_head
        qh = qkv[:, c0:c0 + dim_head]
        kh = qkv[:, inner + c0:inner + c0 + dim_head]
        vh = qkv[:, 2 * inner + c0:2 * inner + c0 + dim_head]
        dots = jax.lax.dot_general(qh, kh, (((1,), (1,)), ((), ())),
                                   preferred_element_type=jnp.float32)
        dots = jnp.where(mask, F32_NEG_MAX, dots)
        dots = dots - jnp.max(dots, axis=-1, keepdims=True)
        e = jnp.exp(dots)
        p = e * pl.reciprocal(jnp.sum(e, axis=-1, keepdims=True), approx=True)
        attn_ref[:, c0:c0 + dim_head] = jnp.dot(p, vh,
                                                preferred_element_type=jnp.float32)

    proj = jnp.dot(attn_ref[...], wo_ref[...], preferred_element_type=jnp.float32)
    x1 = proj + bo_ref[...] + xn                  # residual from bn(x) (reference wiring)

    h1 = _gelu_tanh(jnp.dot(x1, w1_ref[...], preferred_element_type=jnp.float32)
                    + b1_ref[...])
    ff = jnp.dot(h1, w2_ref[...], preferred_element_type=jnp.float32) + b2_ref[...]
    acc_ref[...] = ff + x1

    # ---------------- epilogue: cls pool + mlp_head (last layer only) --------
    @pl.when(d == depth - 1)
    def _():
        cls_vec = acc_ref[0:1, :]
        hn = _layernorm(cls_vec, hg_ref[...], hb_ref[...])
        out_ref[...] = (jnp.dot(hn, hw_ref[...], preferred_element_type=jnp.float32)
                        + hbias_ref[...])


# ----------------------------------------------------------------------------
# pallas_call wrapper
# ----------------------------------------------------------------------------
def pallas_vit(patches, params, *, heads, dim_head, num_classes):
    batch, n_patch, patch_dim = patches.shape
    dim = params["patch_w"].shape[1]
    depth = params["wqkv"].shape[0]
    inner = heads * dim_head
    mlp_dim = params["w1"].shape[2]
    n_tok = n_patch + 1
    n_tok_pad = ((n_tok + 7) // 8) * 8            # sublane-aligned token count

    def full2d(shape):
        return pl.BlockSpec(shape, lambda b, d: (0, 0))

    def per_layer(s1, s2):
        return pl.BlockSpec((None, s1, s2), lambda b, d: (d, 0, 0))

    in_specs = [
        pl.BlockSpec((None, n_patch, patch_dim), lambda b, d: (b, 0, 0)),  # patches
        full2d((1, patch_dim)),                                            # SPT ln gamma
        full2d((1, patch_dim)),                                            # SPT ln beta
        full2d((patch_dim, dim)),                                          # SPT linear w
        full2d((1, dim)),                                                  # SPT linear b
        full2d((1, dim)),                                                  # cls token
        full2d((n_tok, dim)),                                              # pos embedding
        full2d((1, dim)),                                                  # bn gamma
        full2d((1, dim)),                                                  # bn beta
        per_layer(dim, 3 * inner),                                         # wqkv
        per_layer(inner, dim),                                             # wo
        per_layer(1, dim),                                                 # bo
        per_layer(dim, mlp_dim),                                           # w1
        per_layer(1, mlp_dim),                                             # b1
        per_layer(mlp_dim, dim),                                           # w2
        per_layer(1, dim),                                                 # b2
        full2d((1, dim)),                                                  # head ln gamma
        full2d((1, dim)),                                                  # head ln beta
        full2d((dim, num_classes)),                                        # head w
        full2d((1, num_classes)),                                          # head b
    ]

    # Explicit VMEM budget from the per-step block sizes (double-buffered
    # inputs + scratch), with headroom for (8,128) tile padding.
    blk_elems = (n_patch * patch_dim + 2 * patch_dim + patch_dim * dim + dim
                 + dim + n_tok * dim + 2 * dim
                 + dim * 3 * inner + inner * dim + dim
                 + dim * mlp_dim + mlp_dim + mlp_dim * dim + dim
                 + 2 * dim + dim * num_classes + num_classes)
    scratch_elems = n_tok_pad * dim + n_tok_pad * inner + num_classes
    vmem_limit = int(4 * (2 * blk_elems + scratch_elems) * 4 + (2 << 20))

    out = pl.pallas_call(
        functools.partial(vit_kernel, n_tok=n_tok, heads=heads, dim_head=dim_head),
        out_shape=jax.ShapeDtypeStruct((batch, 1, num_classes), jnp.float32),
        grid=(batch, depth),
        in_specs=in_specs,
        out_specs=pl.BlockSpec((None, 1, num_classes), lambda b, d: (b, 0, 0)),
        scratch_shapes=[pltpu.VMEM((n_tok_pad, dim), jnp.float32),     # activations
                        pltpu.VMEM((n_tok_pad, inner), jnp.float32)],  # attn heads
        compiler_params=pltpu.CompilerParams(
            dimension_semantics=("parallel", "arbitrary"),
            vmem_limit_bytes=vmem_limit),
    )(patches,
      params["patch_ln_g"].reshape(1, patch_dim),
      params["patch_ln_b"].reshape(1, patch_dim),
      params["patch_w"],
      params["patch_b"].reshape(1, dim),
      params["cls"].reshape(1, dim),
      params["pos"][:n_tok],
      params["bn_g"].reshape(1, dim),
      params["bn_b"].reshape(1, dim),
      params["wqkv"], params["wo"], params["bo"],
      params["w1"], params["b1"], params["w2"], params["b2"],
      params["head_ln_g"].reshape(1, dim),
      params["head_ln_b"].reshape(1, dim),
      params["head_w"],
      params["head_b"].reshape(1, num_classes))
    return out.reshape(batch, num_classes)


# ----------------------------------------------------------------------------
# parameter init (deterministic synthetic weights; per-layer weights stacked
# along a leading depth axis so one pallas_call covers the whole network)
# ----------------------------------------------------------------------------
def init_params(key, *, dim, depth, heads, dim_head, mlp_dim, num_classes,
                patch_size, channels, num_patches):
    patch_dim = patch_size * patch_size * 5 * channels
    inner = heads * dim_head
    keys = iter(jax.random.split(key, 10))

    def nrm(shape, std=0.02):
        return jax.random.normal(next(keys), shape, jnp.float32) * std

    # TODO(synk): TicketLinear's lottery-ticket masking is not defined in the
    # reference; treated as a plain Linear with deterministic random weights.
    wqkv = nrm((depth, dim, inner * 3))
    # Fold the LSA temperature exp(log(dim_head**-0.5)) into the Q columns at
    # parameter-build time (zero runtime cost).
    # TODO(synk): torch temperature is a learnable scalar; only its init value
    # is represented here.
    wqkv = wqkv.at[:, :, :inner].multiply(float(dim_head) ** -0.5)

    return {
        "patch_ln_g": jnp.ones((patch_dim,), jnp.float32),
        "patch_ln_b": jnp.zeros((patch_dim,), jnp.float32),
        "patch_w": nrm((patch_dim, dim)),
        "patch_b": jnp.zeros((dim,), jnp.float32),
        "pos": jax.random.normal(next(keys), (num_patches + 1, dim), jnp.float32),
        "cls": jax.random.normal(next(keys), (1, dim), jnp.float32),
        "bn_g": jnp.ones((dim,), jnp.float32),
        "bn_b": jnp.zeros((dim,), jnp.float32),
        "head_ln_g": jnp.ones((dim,), jnp.float32),
        "head_ln_b": jnp.zeros((dim,), jnp.float32),
        "head_w": nrm((dim, num_classes)),
        "head_b": jnp.zeros((num_classes,), jnp.float32),
        "wqkv": wqkv,
        "wo": nrm((depth, inner, dim)),
        "bo": jnp.zeros((depth, 1, dim), jnp.float32),
        "w1": nrm((depth, dim, mlp_dim)),
        "b1": jnp.zeros((depth, 1, mlp_dim), jnp.float32),
        "w2": nrm((depth, mlp_dim, dim)),
        "b2": jnp.zeros((depth, 1, dim), jnp.float32),
    }


# ----------------------------------------------------------------------------
# forward pass (SPT shift/rearrange is pure data-movement glue in XLA)
# ----------------------------------------------------------------------------
def vit_forward(img, params, *, patch_size, heads, dim_head, num_classes):
    B, C, H, W = img.shape

    # SPT: 4 shifted copies concatenated on channels (F.pad shift order).
    right = jnp.pad(img, ((0, 0), (0, 0), (0, 0), (1, 0)))[:, :, :, :W]
    left = jnp.pad(img, ((0, 0), (0, 0), (0, 0), (0, 1)))[:, :, :, 1:]
    down = jnp.pad(img, ((0, 0), (0, 0), (1, 0), (0, 0)))[:, :, :H, :]
    up = jnp.pad(img, ((0, 0), (0, 0), (0, 1), (0, 0)))[:, :, 1:, :]
    xs = jnp.concatenate([img, right, left, down, up], axis=1)     # (B, 5C, H, W)

    # rearrange 'b c (h p1) (w p2) -> b (h w) (p1 p2 c)'
    p = patch_size
    gh, gw = H // p, W // p
    xp = xs.reshape(B, 5 * C, gh, p, gw, p).transpose(0, 2, 4, 3, 5, 1)
    patches = xp.reshape(B, gh * gw, p * p * 5 * C)                # (B, Np, patch_dim)

    return pallas_vit(patches, params, heads=heads, dim_head=dim_head,
                      num_classes=num_classes)


# ----------------------------------------------------------------------------
if __name__ == "__main__":
    key = jax.random.PRNGKey(0)
    k_img, k_par = jax.random.split(key)

    # Small, lane-dense configuration consistent with the module's constraints.
    B, C, H, W = 2, 3, 16, 16
    patch_size = 4
    dim, depth, heads, dim_head, mlp_dim, num_classes = 128, 2, 4, 32, 256, 10
    num_patches = (H // patch_size) * (W // patch_size)

    img = jax.random.normal(k_img, (B, C, H, W), jnp.float32)
    params = init_params(
        k_par, dim=dim, depth=depth, heads=heads, dim_head=dim_head,
        mlp_dim=mlp_dim, num_classes=num_classes, patch_size=patch_size,
        channels=C, num_patches=num_patches)

    fwd = jax.jit(functools.partial(
        vit_forward, patch_size=patch_size, heads=heads, dim_head=dim_head,
        num_classes=num_classes))
    logits = fwd(img, params)
    jax.block_until_ready(logits)

    assert logits.shape == (B, num_classes), logits.shape
    assert bool(jnp.all(jnp.isfinite(logits)))
    print("KERNEL_OK")
</pallas_src>

<mosaic_0001>
module attributes {stable_mosaic.version = 11 : i64} {
  func.func @vit_kernel(%arg0: i32, %arg1: i32, %arg2: memref<1x16x240xf32, #tpu.memory_space<vmem>>, %arg3: memref<1x240xf32, #tpu.memory_space<vmem>>, %arg4: memref<1x240xf32, #tpu.memory_space<vmem>>, %arg5: memref<240x128xf32, #tpu.memory_space<vmem>>, %arg6: memref<1x128xf32, #tpu.memory_space<vmem>>, %arg7: memref<1x128xf32, #tpu.memory_space<vmem>>, %arg8: memref<17x128xf32, #tpu.memory_space<vmem>>, %arg9: memref<1x128xf32, #tpu.memory_space<vmem>>, %arg10: memref<1x128xf32, #tpu.memory_space<vmem>>, %arg11: memref<1x128x384xf32, #tpu.memory_space<vmem>>, %arg12: memref<1x128x128xf32, #tpu.memory_space<vmem>>, %arg13: memref<1x1x128xf32, #tpu.memory_space<vmem>>, %arg14: memref<1x128x256xf32, #tpu.memory_space<vmem>>, %arg15: memref<1x1x256xf32, #tpu.memory_space<vmem>>, %arg16: memref<1x256x128xf32, #tpu.memory_space<vmem>>, %arg17: memref<1x1x128xf32, #tpu.memory_space<vmem>>, %arg18: memref<1x128xf32, #tpu.memory_space<vmem>>, %arg19: memref<1x128xf32, #tpu.memory_space<vmem>>, %arg20: memref<128x10xf32, #tpu.memory_space<vmem>>, %arg21: memref<1x10xf32, #tpu.memory_space<vmem>>, %arg22: memref<1x1x10xf32, #tpu.memory_space<vmem>>, %arg23: memref<24x128xf32, #tpu.memory_space<vmem>>, %arg24: memref<24x128xf32, #tpu.memory_space<vmem>>) attributes {dimension_semantics = [#tpu.dimension_semantics<parallel>, #tpu.dimension_semantics<arbitrary>], iteration_bounds = array<i64: 2, 2>, scalar_prefetch = 0 : i64, scratch_operands = 2 : i64, tpu.core_type = #tpu.core_type<tc>, window_params = [{transform_indices = @transform_0, window_bounds = array<i64: 1, 16, 240>}, {pipeline_mode = #tpu.pipeline_mode<synchronous>, transform_indices = @transform_1, window_bounds = array<i64: 1, 240>}, {pipeline_mode = #tpu.pipeline_mode<synchronous>, transform_indices = @transform_2, window_bounds = array<i64: 1, 240>}, {pipeline_mode = #tpu.pipeline_mode<synchronous>, transform_indices = @transform_3, window_bounds = array<i64: 240, 128>}, {pipeline_mode = #tpu.pipeline_mode<synchronous>, transform_indices = @transform_4, window_bounds = array<i64: 1, 128>}, {pipeline_mode = #tpu.pipeline_mode<synchronous>, transform_indices = @transform_5, window_bounds = array<i64: 1, 128>}, {pipeline_mode = #tpu.pipeline_mode<synchronous>, transform_indices = @transform_6, window_bounds = array<i64: 17, 128>}, {pipeline_mode = #tpu.pipeline_mode<synchronous>, transform_indices = @transform_7, window_bounds = array<i64: 1, 128>}, {pipeline_mode = #tpu.pipeline_mode<synchronous>, transform_indices = @transform_8, window_bounds = array<i64: 1, 128>}, {transform_indices = @transform_9, window_bounds = array<i64: 1, 128, 384>}, {transform_indices = @transform_10, window_bounds = array<i64: 1, 128, 128>}, {transform_indices = @transform_11, window_bounds = array<i64: 1, 1, 128>}, {transform_indices = @transform_12, window_bounds = array<i64: 1, 128, 256>}, {transform_indices = @transform_13, window_bounds = array<i64: 1, 1, 256>}, {transform_indices = @transform_14, window_bounds = array<i64: 1, 256, 128>}, {transform_indices = @transform_15, window_bounds = array<i64: 1, 1, 128>}, {pipeline_mode = #tpu.pipeline_mode<synchronous>, transform_indices = @transform_16, window_bounds = array<i64: 1, 128>}, {pipeline_mode = #tpu.pipeline_mode<synchronous>, transform_indices = @transform_17, window_bounds = array<i64: 1, 128>}, {pipeline_mode = #tpu.pipeline_mode<synchronous>, transform_indices = @transform_18, window_bounds = array<i64: 128, 10>}, {pipeline_mode = #tpu.pipeline_mode<synchronous>, transform_indices = @transform_19, window_bounds = array<i64: 1, 10>}, {transform_indices = @transform_20, window_bounds = array<i64: 1, 1, 10>}]} {
    %c0_i32 = arith.constant 0 : i32
    %0 = arith.cmpi eq, %arg1, %c0_i32 : i32
    %1 = arith.extui %0 : i1 to i32
    %c0_i32_0 = arith.constant 0 : i32
    %2 = arith.cmpi ne, %1, %c0_i32_0 : i32
    scf.if %2 {
      %c0_69 = arith.constant 0 : index
      %c0_70 = arith.constant 0 : index
      %c0_71 = arith.constant 0 : index
      %150 = vector.load %arg2[%c0_69, %c0_70, %c0_71] : memref<1x16x240xf32, #tpu.memory_space<vmem>>, vector<1x16x240xf32>
      %151 = vector.shape_cast %150 : vector<1x16x240xf32> to vector<16x240xf32>
      %c0_72 = arith.constant 0 : index
      %c0_73 = arith.constant 0 : index
      %152 = vector.load %arg3[%c0_72, %c0_73] : memref<1x240xf32, #tpu.memory_space<vmem>>, vector<1x240xf32>
      %c0_74 = arith.constant 0 : index
      %c0_75 = arith.constant 0 : index
      %153 = vector.load %arg4[%c0_74, %c0_75] : memref<1x240xf32, #tpu.memory_space<vmem>>, vector<1x240xf32>
      %cst_76 = arith.constant dense<0.000000e+00> : vector<16xf32>
      %154 = vector.multi_reduction <add>, %151, %cst_76 [1] : vector<16x240xf32> to vector<16xf32>
      %155 = vector.shape_cast %154 : vector<16xf32> to vector<16x1xf32>
      %cst_77 = arith.constant 2.400000e+02 : f32
      %156 = vector.broadcast %cst_77 : f32 to vector<16x1xf32>
      %157 = arith.divf %155, %156 : vector<16x1xf32>
      %158 = vector.broadcast %157 : vector<16x1xf32> to vector<16x240xf32>
      %159 = arith.subf %151, %158 : vector<16x240xf32>
      %160 = arith.mulf %159, %159 : vector<16x240xf32>
      %cst_78 = arith.constant dense<0.000000e+00> : vector<16xf32>
      %161 = vector.multi_reduction <add>, %160, %cst_78 [1] : vector<16x240xf32> to vector<16xf32>
      %162 = vector.shape_cast %161 : vector<16xf32> to vector<16x1xf32>
      %cst_79 = arith.constant 2.400000e+02 : f32
      %163 = vector.broadcast %cst_79 : f32 to vector<16x1xf32>
      %164 = arith.divf %162, %163 : vector<16x1xf32>
      %165 = vector.broadcast %157 : vector<16x1xf32> to vector<16x240xf32>
      %166 = arith.subf %151, %165 : vector<16x240xf32>
      %cst_80 = arith.constant 9.99999974E-6 : f32
      %167 = vector.broadcast %cst_80 : f32 to vector<16x1xf32>
      %168 = arith.addf %164, %167 : vector<16x1xf32>
      %169 = math.rsqrt %168 : vector<16x1xf32>
      %170 = vector.broadcast %169 : vector<16x1xf32> to vector<16x240xf32>
      %171 = arith.mulf %166, %170 : vector<16x240xf32>
      %172 = vector.broadcast %152 : vector<1x240xf32> to vector<16x240xf32>
      %173 = arith.mulf %171, %172 : vector<16x240xf32>
      %174 = vector.broadcast %153 : vector<1x240xf32> to vector<16x240xf32>
      %175 = arith.addf %173, %174 : vector<16x240xf32>
      %c0_81 = arith.constant 0 : index
      %c0_82 = arith.constant 0 : index
      %176 = vector.load %arg5[%c0_81, %c0_82] : memref<240x128xf32, #tpu.memory_space<vmem>>, vector<240x128xf32>
      %cst_83 = arith.constant dense<0.000000e+00> : vector<16x128xf32>
      %177 = tpu.matmul %175, %176, %cst_83 {dimension_numbers = #tpu.dot_dimension_numbers<[1], [0], [0], [1], [0, 0, 1, 1], [], []>} : vector<16x240xf32>, vector<240x128xf32>, vector<16x128xf32> -> vector<16x128xf32>
      %c0_84 = arith.constant 0 : index
      %c0_85 = arith.constant 0 : index
      %178 = vector.load %arg6[%c0_84, %c0_85] : memref<1x128xf32, #tpu.memory_space<vmem>>, vector<1x128xf32>
      %179 = vector.broadcast %178 : vector<1x128xf32> to vector<16x128xf32>
      %180 = arith.addf %177, %179 : vector<16x128xf32>
      %cst_86 = arith.constant 0.000000e+00 : f32
      %181 = vector.broadcast %cst_86 : f32 to vector<24x128xf32>
      %c0_87 = arith.constant 0 : index
      %c0_88 = arith.constant 0 : index
      %182 = vector.load %arg23[%c0_87, %c0_88] : memref<24x128xf32, #tpu.memory_space<vmem>>, vector<24x128xf32>
      tpu.vector_store %arg23[%c0_87, %c0_88], %181 {strides = array<i32>} : memref<24x128xf32, #tpu.memory_space<vmem>>, vector<24x128xf32>,
      %c0_89 = arith.constant 0 : index
      %c0_90 = arith.constant 0 : index
      %183 = vector.load %arg7[%c0_89, %c0_90] : memref<1x128xf32, #tpu.memory_space<vmem>>, vector<1x128xf32>
      %c0_91 = arith.constant 0 : index
      %c0_92 = arith.constant 0 : index
      %184 = vector.load %arg8[%c0_91, %c0_92] : memref<17x128xf32, #tpu.memory_space<vmem>>, vector<1x128xf32>
      %185 = arith.addf %183, %184 : vector<1x128xf32>
      %c0_93 = arith.constant 0 : index
      %c0_94 = arith.constant 0 : index
      %186 = vector.load %arg23[%c0_93, %c0_94] : memref<24x128xf32, #tpu.memory_space<vmem>>, vector<1x128xf32>
      tpu.vector_store %arg23[%c0_93, %c0_94], %185 {strides = array<i32>} : memref<24x128xf32, #tpu.memory_space<vmem>>, vector<1x128xf32>,
      %c1 = arith.constant 1 : index
      %c0_95 = arith.constant 0 : index
      %187 = vector.load %arg8[%c1, %c0_95] : memref<17x128xf32, #tpu.memory_space<vmem>>, vector<16x128xf32>
      %188 = arith.addf %180, %187 : vector<16x128xf32>
      %c1_96 = arith.constant 1 : index
      %c0_97 = arith.constant 0 : index
      %189 = vector.load %arg23[%c1_96, %c0_97] : memref<24x128xf32, #tpu.memory_space<vmem>>, vector<16x128xf32>
      tpu.vector_store %arg23[%c1_96, %c0_97], %188 {strides = array<i32>} : memref<24x128xf32, #tpu.memory_space<vmem>>, vector<16x128xf32>,
    } else {
    }
    %c0 = arith.constant 0 : index
    %c0_1 = arith.constant 0 : index
    %3 = vector.load %arg23[%c0, %c0_1] : memref<24x128xf32, #tpu.memory_space<vmem>>, vector<24x128xf32>
    %c0_2 = arith.constant 0 : index
    %c0_3 = arith.constant 0 : index
    %4 = vector.load %arg9[%c0_2, %c0_3] : memref<1x128xf32, #tpu.memory_space<vmem>>, vector<1x128xf32>
    %c0_4 = arith.constant 0 : index
    %c0_5 = arith.constant 0 : index
    %5 = vector.load %arg10[%c0_4, %c0_5] : memref<1x128xf32, #tpu.memory_space<vmem>>, vector<1x128xf32>
    %cst = arith.constant dense<0.000000e+00> : vector<24xf32>
    %6 = vector.multi_reduction <add>, %3, %cst [1] : vector<24x128xf32> to vector<24xf32>
    %7 = vector.shape_cast %6 : vector<24xf32> to vector<24x1xf32>
    %cst_6 = arith.constant 1.280000e+02 : f32
    %8 = vector.broadcast %cst_6 : f32 to vector<24x1xf32>
    %9 = arith.divf %7, %8 : vector<24x1xf32>
    %10 = vector.broadcast %9 : vector<24x1xf32> to vector<24x128xf32>
    %11 = arith.subf %3, %10 : vector<24x128xf32>
    %12 = arith.mulf %11, %11 : vector<24x128xf32>
    %cst_7 = arith.constant dense<0.000000e+00> : vector<24xf32>
    %13 = vector.multi_reduction <add>, %12, %cst_7 [1] : vector<24x128xf32> to vector<24xf32>
    %14 = vector.shape_cast %13 : vector<24xf32> to vector<24x1xf32>
    %cst_8 = arith.constant 1.280000e+02 : f32
    %15 = vector.broadcast %cst_8 : f32 to vector<24x1xf32>
    %16 = arith.divf %14, %15 : vector<24x1xf32>
    %17 = vector.broadcast %9 : vector<24x1xf32> to vector<24x128xf32>
    %18 = arith.subf %3, %17 : vector<24x128xf32>
    %cst_9 = arith.constant 9.99999974E-6 : f32
    %19 = vector.broadcast %cst_9 : f32 to vector<24x1xf32>
    %20 = arith.addf %16, %19 : vector<24x1xf32>
    %21 = math.rsqrt %20 : vector<24x1xf32>
    %22 = vector.broadcast %21 : vector<24x1xf32> to vector<24x128xf32>
    %23 = arith.mulf %18, %22 : vector<24x128xf32>
    %24 = vector.broadcast %4 : vector<1x128xf32> to vector<24x128xf32>
    %25 = arith.mulf %23, %24 : vector<24x128xf32>
    %26 = vector.broadcast %5 : vector<1x128xf32> to vector<24x128xf32>
    %27 = arith.addf %25, %26 : vector<24x128xf32>
    %c0_10 = arith.constant 0 : index
    %c0_11 = arith.constant 0 : index
    %c0_12 = arith.constant 0 : index
    %28 = vector.load %arg11[%c0_10, %c0_11, %c0_12] : memref<1x128x384xf32, #tpu.memory_space<vmem>>, vector<1x128x384xf32>
    %29 = vector.shape_cast %28 : vector<1x128x384xf32> to vector<128x384xf32>
    %cst_13 = arith.constant dense<0.000000e+00> : vector<24x384xf32>
    %30 = tpu.matmul %27, %29, %cst_13 {dimension_numbers = #tpu.dot_dimension_numbers<[1], [0], [0], [1], [0, 0, 1, 1], [], []>} : vector<24x128xf32>, vector<128x384xf32>, vector<24x384xf32> -> vector<24x384xf32>
    %31 = tpu.iota {dimensions = array<i32: 0>} : vector<24x24xi32>
    %32 = tpu.iota {dimensions = array<i32: 1>} : vector<24x24xi32>
    %33 = arith.cmpi eq, %31, %32 : vector<24x24xi32>
    %c17_i32 = arith.constant 17 : i32
    %34 = vector.broadcast %c17_i32 : i32 to vector<24x24xi32>
    %35 = arith.cmpi sge, %32, %34 : vector<24x24xi32>
    %36 = arith.ori %33, %35 : vector<24x24xi1>
    %37 = vector.extract_strided_slice %30 {offsets = [0, 0], sizes = [24, 32], strides = [1, 1]} : vector<24x384xf32> to vector<24x32xf32>
    %38 = vector.extract_strided_slice %30 {offsets = [0, 128], sizes = [24, 32], strides = [1, 1]} : vector<24x384xf32> to vector<24x32xf32>
    %39 = vector.extract_strided_slice %30 {offsets = [0, 256], sizes = [24, 32], strides = [1, 1]} : vector<24x384xf32> to vector<24x32xf32>
    %cst_14 = arith.constant dense<0.000000e+00> : vector<24x24xf32>
    %40 = tpu.matmul %37, %38, %cst_14 {dimension_numbers = #tpu.dot_dimension_numbers<[1], [1], [0], [0], [0, 0, 1, 0], [], []>} : vector<24x32xf32>, vector<24x32xf32>, vector<24x24xf32> -> vector<24x24xf32>
    %cst_15 = arith.constant -3.40282347E+38 : f32
    %41 = vector.broadcast %cst_15 : f32 to vector<24x24xf32>
    %42 = arith.select %36, %41, %40 : vector<24x24xi1>, vector<24x24xf32>
    %cst_16 = arith.constant dense<0xFF800000> : vector<24xf32>
    %43 = vector.multi_reduction <maximumf>, %42, %cst_16 [1] : vector<24x24xf32> to vector<24xf32>
    %44 = vector.shape_cast %43 : vector<24xf32> to vector<24x1xf32>
    %45 = vector.broadcast %44 : vector<24x1xf32> to vector<24x24xf32>
    %46 = arith.subf %42, %45 : vector<24x24xf32>
    %47 = math.exp %46 : vector<24x24xf32>
    %cst_17 = arith.constant dense<0.000000e+00> : vector<24xf32>
    %48 = vector.multi_reduction <add>, %47, %cst_17 [1] : vector<24x24xf32> to vector<24xf32>
    %49 = vector.shape_cast %48 : vector<24xf32> to vector<24x1xf32>
    %50 = tpu.reciprocal %49 {approx = true} : vector<24x1xf32> -> vector<24x1xf32>
    %51 = vector.broadcast %50 : vector<24x1xf32> to vector<24x24xf32>
    %52 = arith.mulf %47, %51 : vector<24x24xf32>
    %cst_18 = arith.constant dense<0.000000e+00> : vector<24x32xf32>
    %53 = tpu.matmul %52, %39, %cst_18 {dimension_numbers = #tpu.dot_dimension_numbers<[1], [0], [0], [1], [0, 0, 1, 1], [], []>} : vector<24x24xf32>, vector<24x32xf32>, vector<24x32xf32> -> vector<24x32xf32>
    %c0_19 = arith.constant 0 : index
    %c0_20 = arith.constant 0 : index
    %54 = vector.load %arg24[%c0_19, %c0_20] : memref<24x128xf32, #tpu.memory_space<vmem>>, vector<24x32xf32>
    tpu.vector_store %arg24[%c0_19, %c0_20], %53 {strides = array<i32>} : memref<24x128xf32, #tpu.memory_space<vmem>>, vector<24x32xf32>,
    %55 = vector.extract_strided_slice %30 {offsets = [0, 32], sizes = [24, 32], strides = [1, 1]} : vector<24x384xf32> to vector<24x32xf32>
    %56 = vector.extract_strided_slice %30 {offsets = [0, 160], sizes = [24, 32], strides = [1, 1]} : vector<24x384xf32> to vector<24x32xf32>
    %57 = vector.extract_strided_slice %30 {offsets = [0, 288], sizes = [24, 32], strides = [1, 1]} : vector<24x384xf32> to vector<24x32xf32>
    %cst_21 = arith.constant dense<0.000000e+00> : vector<24x24xf32>
    %58 = tpu.matmul %55, %56, %cst_21 {dimension_numbers = #tpu.dot_dimension_numbers<[1], [1], [0], [0], [0, 0, 1, 0], [], []>} : vector<24x32xf32>, vector<24x32xf32>, vector<24x24xf32> -> vector<24x24xf32>
    %cst_22 = arith.constant -3.40282347E+38 : f32
    %59 = vector.broadcast %cst_22 : f32 to vector<24x24xf32>
    %60 = arith.select %36, %59, %58 : vector<24x24xi1>, vector<24x24xf32>
    %cst_23 = arith.constant dense<0xFF800000> : vector<24xf32>
    %61 = vector.multi_reduction <maximumf>, %60, %cst_23 [1] : vector<24x24xf32> to vector<24xf32>
    %62 = vector.shape_cast %61 : vector<24xf32> to vector<24x1xf32>
    %63 = vector.broadcast %62 : vector<24x1xf32> to vector<24x24xf32>
    %64 = arith.subf %60, %63 : vector<24x24xf32>
    %65 = math.exp %64 : vector<24x24xf32>
    %cst_24 = arith.constant dense<0.000000e+00> : vector<24xf32>
    %66 = vector.multi_reduction <add>, %65, %cst_24 [1] : vector<24x24xf32> to vector<24xf32>
    %67 = vector.shape_cast %66 : vector<24xf32> to vector<24x1xf32>
    %68 = tpu.reciprocal %67 {approx = true} : vector<24x1xf32> -> vector<24x1xf32>
    %69 = vector.broadcast %68 : vector<24x1xf32> to vector<24x24xf32>
    %70 = arith.mulf %65, %69 : vector<24x24xf32>
    %cst_25 = arith.constant dense<0.000000e+00> : vector<24x32xf32>
    %71 = tpu.matmul %70, %57, %cst_25 {dimension_numbers = #tpu.dot_dimension_numbers<[1], [0], [0], [1], [0, 0, 1, 1], [], []>} : vector<24x24xf32>, vector<24x32xf32>, vector<24x32xf32> -> vector<24x32xf32>
    %c0_26 = arith.constant 0 : index
    %c32 = arith.constant 32 : index
    %72 = vector.load %arg24[%c0_26, %c32] : memref<24x128xf32, #tpu.memory_space<vmem>>, vector<24x32xf32>
    tpu.vector_store %arg24[%c0_26, %c32], %71 {strides = array<i32>} : memref<24x128xf32, #tpu.memory_space<vmem>>, vector<24x32xf32>,
    %73 = vector.extract_strided_slice %30 {offsets = [0, 64], sizes = [24, 32], strides = [1, 1]} : vector<24x384xf32> to vector<24x32xf32>
    %74 = vector.extract_strided_slice %30 {offsets = [0, 192], sizes = [24, 32], strides = [1, 1]} : vector<24x384xf32> to vector<24x32xf32>
    %75 = vector.extract_strided_slice %30 {offsets = [0, 320], sizes = [24, 32], strides = [1, 1]} : vector<24x384xf32> to vector<24x32xf32>
    %cst_27 = arith.constant dense<0.000000e+00> : vector<24x24xf32>
    %76 = tpu.matmul %73, %74, %cst_27 {dimension_numbers = #tpu.dot_dimension_numbers<[1], [1], [0], [0], [0, 0, 1, 0], [], []>} : vector<24x32xf32>, vector<24x32xf32>, vector<24x24xf32> -> vector<24x24xf32>
    %cst_28 = arith.constant -3.40282347E+38 : f32
    %77 = vector.broadcast %cst_28 : f32 to vector<24x24xf32>
    %78 = arith.select %36, %77, %76 : vector<24x24xi1>, vector<24x24xf32>
    %cst_29 = arith.constant dense<0xFF800000> : vector<24xf32>
    %79 = vector.multi_reduction <maximumf>, %78, %cst_29 [1] : vector<24x24xf32> to vector<24xf32>
    %80 = vector.shape_cast %79 : vector<24xf32> to vector<24x1xf32>
    %81 = vector.broadcast %80 : vector<24x1xf32> to vector<24x24xf32>
    %82 = arith.subf %78, %81 : vector<24x24xf32>
    %83 = math.exp %82 : vector<24x24xf32>
    %cst_30 = arith.constant dense<0.000000e+00> : vector<24xf32>
    %84 = vector.multi_reduction <add>, %83, %cst_30 [1] : vector<24x24xf32> to vector<24xf32>
    %85 = vector.shape_cast %84 : vector<24xf32> to vector<24x1xf32>
    %86 = tpu.reciprocal %85 {approx = true} : vector<24x1xf32> -> vector<24x1xf32>
    %87 = vector.broadcast %86 : vector<24x1xf32> to vector<24x24xf32>
    %88 = arith.mulf %83, %87 : vector<24x24xf32>
    %cst_31 = arith.constant dense<0.000000e+00> : vector<24x32xf32>
    %89 = tpu.matmul %88, %75, %cst_31 {dimension_numbers = #tpu.dot_dimension_numbers<[1], [0], [0], [1], [0, 0, 1, 1], [], []>} : vector<24x24xf32>, vector<24x32xf32>, vector<24x32xf32> -> vector<24x32xf32>
    %c0_32 = arith.constant 0 : index
    %c64 = arith.constant 64 : index
    %90 = vector.load %arg24[%c0_32, %c64] : memref<24x128xf32, #tpu.memory_space<vmem>>, vector<24x32xf32>
    tpu.vector_store %arg24[%c0_32, %c64], %89 {strides = array<i32>} : memref<24x128xf32, #tpu.memory_space<vmem>>, vector<24x32xf32>,
    %91 = vector.extract_strided_slice %30 {offsets = [0, 96], sizes = [24, 32], strides = [1, 1]} : vector<24x384xf32> to vector<24x32xf32>
    %92 = vector.extract_strided_slice %30 {offsets = [0, 224], sizes = [24, 32], strides = [1, 1]} : vector<24x384xf32> to vector<24x32xf32>
    %93 = vector.extract_strided_slice %30 {offsets = [0, 352], sizes = [24, 32], strides = [1, 1]} : vector<24x384xf32> to vector<24x32xf32>
    %cst_33 = arith.constant dense<0.000000e+00> : vector<24x24xf32>
    %94 = tpu.matmul %91, %92, %cst_33 {dimension_numbers = #tpu.dot_dimension_numbers<[1], [1], [0], [0], [0, 0, 1, 0], [], []>} : vector<24x32xf32>, vector<24x32xf32>, vector<24x24xf32> -> vector<24x24xf32>
    %cst_34 = arith.constant -3.40282347E+38 : f32
    %95 = vector.broadcast %cst_34 : f32 to vector<24x24xf32>
    %96 = arith.select %36, %95, %94 : vector<24x24xi1>, vector<24x24xf32>
    %cst_35 = arith.constant dense<0xFF800000> : vector<24xf32>
    %97 = vector.multi_reduction <maximumf>, %96, %cst_35 [1] : vector<24x24xf32> to vector<24xf32>
    %98 = vector.shape_cast %97 : vector<24xf32> to vector<24x1xf32>
    %99 = vector.broadcast %98 : vector<24x1xf32> to vector<24x24xf32>
    %100 = arith.subf %96, %99 : vector<24x24xf32>
    %101 = math.exp %100 : vector<24x24xf32>
    %cst_36 = arith.constant dense<0.000000e+00> : vector<24xf32>
    %102 = vector.multi_reduction <add>, %101, %cst_36 [1] : vector<24x24xf32> to vector<24xf32>
    %103 = vector.shape_cast %102 : vector<24xf32> to vector<24x1xf32>
    %104 = tpu.reciprocal %103 {approx = true} : vector<24x1xf32> -> vector<24x1xf32>
    %105 = vector.broadcast %104 : vector<24x1xf32> to vector<24x24xf32>
    %106 = arith.mulf %101, %105 : vector<24x24xf32>
    %cst_37 = arith.constant dense<0.000000e+00> : vector<24x32xf32>
    %107 = tpu.matmul %106, %93, %cst_37 {dimension_numbers = #tpu.dot_dimension_numbers<[1], [0], [0], [1], [0, 0, 1, 1], [], []>} : vector<24x24xf32>, vector<24x32xf32>, vector<24x32xf32> -> vector<24x32xf32>
    %c0_38 = arith.constant 0 : index
    %c96 = arith.constant 96 : index
    %108 = vector.load %arg24[%c0_38, %c96] : memref<24x128xf32, #tpu.memory_space<vmem>>, vector<24x32xf32>
    tpu.vector_store %arg24[%c0_38, %c96], %107 {strides = array<i32>} : memref<24x128xf32, #tpu.memory_space<vmem>>, vector<24x32xf32>,
    %c0_39 = arith.constant 0 : index
    %c0_40 = arith.constant 0 : index
    %109 = vector.load %arg24[%c0_39, %c0_40] : memref<24x128xf32, #tpu.memory_space<vmem>>, vector<24x128xf32>
    %c0_41 = arith.constant 0 : index
    %c0_42 = arith.constant 0 : index
    %c0_43 = arith.constant 0 : index
    %110 = vector.load %arg12[%c0_41, %c0_42, %c0_43] : memref<1x128x128xf32, #tpu.memory_space<vmem>>, vector<1x128x128xf32>
    %111 = vector.shape_cast %110 : vector<1x128x128xf32> to vector<128x128xf32>
    %cst_44 = arith.constant dense<0.000000e+00> : vector<24x128xf32>
    %112 = tpu.matmul %109, %111, %cst_44 {dimension_numbers = #tpu.dot_dimension_numbers<[1], [0], [0], [1], [0, 0, 1, 1], [], []>} : vector<24x128xf32>, vector<128x128xf32>, vector<24x128xf32> -> vector<24x128xf32>
    %c0_45 = arith.constant 0 : index
    %c0_46 = arith.constant 0 : index
    %c0_47 = arith.constant 0 : index
    %113 = vector.load %arg13[%c0_45, %c0_46, %c0_47] : memref<1x1x128xf32, #tpu.memory_space<vmem>>, vector<1x1x128xf32>
    %114 = vector.shape_cast %113 : vector<1x1x128xf32> to vector<1x128xf32>
    %115 = vector.broadcast %114 : vector<1x128xf32> to vector<24x128xf32>
    %116 = arith.addf %112, %115 : vector<24x128xf32>
    %117 = arith.addf %116, %27 : vector<24x128xf32>
    %c0_48 = arith.constant 0 : index
    %c0_49 = arith.constant 0 : index
    %c0_50 = arith.constant 0 : index
    %118 = vector.load %arg14[%c0_48, %c0_49, %c0_50] : memref<1x128x256xf32, #tpu.memory_space<vmem>>, vector<1x128x256xf32>
    %119 = vector.shape_cast %118 : vector<1x128x256xf32> to vector<128x256xf32>
    %cst_51 = arith.constant dense<0.000000e+00> : vector<24x256xf32>
    %120 = tpu.matmul %117, %119, %cst_51 {dimension_numbers = #tpu.dot_dimension_numbers<[1], [0], [0], [1], [0, 0, 1, 1], [], []>} : vector<24x128xf32>, vector<128x256xf32>, vector<24x256xf32> -> vector<24x256xf32>
    %c0_52 = arith.constant 0 : index
    %c0_53 = arith.constant 0 : index
    %c0_54 = arith.constant 0 : index
    %121 = vector.load %arg15[%c0_52, %c0_53, %c0_54] : memref<1x1x256xf32, #tpu.memory_space<vmem>>, vector<1x1x256xf32>
    %122 = vector.shape_cast %121 : vector<1x1x256xf32> to vector<1x256xf32>
    %123 = vector.broadcast %122 : vector<1x256xf32> to vector<24x256xf32>
    %124 = arith.addf %120, %123 : vector<24x256xf32>
    %cst_55 = arith.constant 5.000000e-01 : f32
    %125 = vector.broadcast %cst_55 : f32 to vector<24x256xf32>
    %126 = arith.mulf %125, %124 : vector<24x256xf32>
    %cst_56 = arith.constant 4.471500e-02 : f32
    %127 = vector.broadcast %cst_56 : f32 to vector<24x256xf32>
    %128 = arith.mulf %127, %124 : vector<24x256xf32>
    %129 = arith.mulf %128, %124 : vector<24x256xf32>
    %130 = arith.mulf %129, %124 : vector<24x256xf32>
    %131 = arith.addf %124, %130 : vector<24x256xf32>
    %cst_57 = arith.constant 0.797884583 : f32
    %132 = vector.broadcast %cst_57 : f32 to vector<24x256xf32>
    %133 = arith.mulf %132, %131 : vector<24x256xf32>
    %134 = math.tanh %133 : vector<24x256xf32>
    %cst_58 = arith.constant 1.000000e+00 : f32
    %135 = vector.broadcast %cst_58 : f32 to vector<24x256xf32>
    %136 = arith.addf %135, %134 : vector<24x256xf32>
    %137 = arith.mulf %126, %136 : vector<24x256xf32>
    %c0_59 = arith.constant 0 : index
    %c0_60 = arith.constant 0 : index
    %c0_61 = arith.constant 0 : index
    %138 = vector.load %arg16[%c0_59, %c0_60, %c0_61] : memref<1x256x128xf32, #tpu.memory_space<vmem>>, vector<1x256x128xf32>
    %139 = vector.shape_cast %138 : vector<1x256x128xf32> to vector<256x128xf32>
    %cst_62 = arith.constant dense<0.000000e+00> : vector<24x128xf32>
    %140 = tpu.matmul %137, %139, %cst_62 {dimension_numbers = #tpu.dot_dimension_numbers<[1], [0], [0], [1], [0, 0, 1, 1], [], []>} : vector<24x256xf32>, vector<256x128xf32>, vector<24x128xf32> -> vector<24x128xf32>
    %c0_63 = arith.constant 0 : index
    %c0_64 = arith.constant 0 : index
    %c0_65 = arith.constant 0 : index
    %141 = vector.load %arg17[%c0_63, %c0_64, %c0_65] : memref<1x1x128xf32, #tpu.memory_space<vmem>>, vector<1x1x128xf32>
    %142 = vector.shape_cast %141 : vector<1x1x128xf32> to vector<1x128xf32>
    %143 = vector.broadcast %142 : vector<1x128xf32> to vector<24x128xf32>
    %144 = arith.addf %140, %143 : vector<24x128xf32>
    %145 = arith.addf %144, %117 : vector<24x128xf32>
    %c0_66 = arith.constant 0 : index
    %c0_67 = arith.constant 0 : index
    %146 = vector.load %arg23[%c0_66, %c0_67] : memref<24x128xf32, #tpu.memory_space<vmem>>, vector<24x128xf32>
    tpu.vector_store %arg23[%c0_66, %c0_67], %145 {strides = array<i32>} : memref<24x128xf32, #tpu.memory_space<vmem>>, vector<24x128xf32>,
    %c1_i32 = arith.constant 1 : i32
    %147 = arith.cmpi eq, %arg1, %c1_i32 : i32
    %148 = arith.extui %147 : i1 to i32
    %c0_i32_68 = arith.constant 0 : i32
    %149 = arith.cmpi ne, %148, %c0_i32_68 : i32
    scf.if %149 {
      %c0_69 = arith.constant 0 : index
      %c0_70 = arith.constant 0 : index
      %150 = vector.load %arg23[%c0_69, %c0_70] : memref<24x128xf32, #tpu.memory_space<vmem>>, vector<1x128xf32>
      %c0_71 = arith.constant 0 : index
      %c0_72 = arith.constant 0 : index
      %151 = vector.load %arg18[%c0_71, %c0_72] : memref<1x128xf32, #tpu.memory_space<vmem>>, vector<1x128xf32>
      %c0_73 = arith.constant 0 : index
      %c0_74 = arith.constant 0 : index
      %152 = vector.load %arg19[%c0_73, %c0_74] : memref<1x128xf32, #tpu.memory_space<vmem>>, vector<1x128xf32>
      %cst_75 = arith.constant dense<0.000000e+00> : vector<1xf32>
      %153 = vector.multi_reduction <add>, %150, %cst_75 [1] : vector<1x128xf32> to vector<1xf32>
      %154 = vector.shape_cast %153 : vector<1xf32> to vector<1x1xf32>
      %cst_76 = arith.constant 1.280000e+02 : f32
      %155 = vector.broadcast %cst_76 : f32 to vector<1x1xf32>
      %156 = arith.divf %154, %155 : vector<1x1xf32>
      %157 = vector.broadcast %156 : vector<1x1xf32> to vector<1x128xf32>
      %158 = arith.subf %150, %157 : vector<1x128xf32>
      %159 = arith.mulf %158, %158 : vector<1x128xf32>
      %cst_77 = arith.constant dense<0.000000e+00> : vector<1xf32>
      %160 = vector.multi_reduction <add>, %159, %cst_77 [1] : vector<1x128xf32> to vector<1xf32>
      %161 = vector.shape_cast %160 : vector<1xf32> to vector<1x1xf32>
      %cst_78 = arith.constant 1.280000e+02 : f32
      %162 = vector.broadcast %cst_78 : f32 to vector<1x1xf32>
      %163 = arith.divf %161, %162 : vector<1x1xf32>
      %164 = vector.broadcast %156 : vector<1x1xf32> to vector<1x128xf32>
      %165 = arith.subf %150, %164 : vector<1x128xf32>
      %cst_79 = arith.constant 9.99999974E-6 : f32
      %166 = vector.broadcast %cst_79 : f32 to vector<1x1xf32>
      %167 = arith.addf %163, %166 : vector<1x1xf32>
      %168 = math.rsqrt %167 : vector<1x1xf32>
      %169 = vector.broadcast %168 : vector<1x1xf32> to vector<1x128xf32>
      %170 = arith.mulf %165, %169 : vector<1x128xf32>
      %171 = arith.mulf %170, %151 : vector<1x128xf32>
      %172 = arith.addf %171, %152 : vector<1x128xf32>
      %c0_80 = arith.constant 0 : index
      %c0_81 = arith.constant 0 : index
      %173 = vector.load %arg20[%c0_80, %c0_81] : memref<128x10xf32, #tpu.memory_space<vmem>>, vector<128x10xf32>
      %cst_82 = arith.constant dense<0.000000e+00> : vector<1x10xf32>
      %174 = tpu.matmul %172, %173, %cst_82 {dimension_numbers = #tpu.dot_dimension_numbers<[1], [0], [0], [1], [0, 0, 1, 1], [], []>} : vector<1x128xf32>, vector<128x10xf32>, vector<1x10xf32> -> vector<1x10xf32>
      %c0_83 = arith.constant 0 : index
      %c0_84 = arith.constant 0 : index
      %175 = vector.load %arg21[%c0_83, %c0_84] : memref<1x10xf32, #tpu.memory_space<vmem>>, vector<1x10xf32>
      %176 = arith.addf %174, %175 : vector<1x10xf32>
      %c0_85 = arith.constant 0 : index
      %c0_86 = arith.constant 0 : index
      %c0_87 = arith.constant 0 : index
      %177 = vector.load %arg22[%c0_85, %c0_86, %c0_87] : memref<1x1x10xf32, #tpu.memory_space<vmem>>, vector<1x1x10xf32>
      %178 = vector.shape_cast %177 : vector<1x1x10xf32> to vector<1x10xf32>
      %179 = vector.shape_cast %176 : vector<1x10xf32> to vector<1x1x10xf32>
      tpu.vector_store %arg22[%c0_85, %c0_86, %c0_87], %179 {strides = array<i32>} : memref<1x1x10xf32, #tpu.memory_space<vmem>>, vector<1x1x10xf32>,
    } else {
    }
    return
  }
  func.func @transform_0(%arg0: i32, %arg1: i32) -> (i32, i32, i32) {
    %c0_i32 = arith.constant 0 : i32
    %c0_i32_0 = arith.constant 0 : i32
    %c0_i32_1 = arith.constant 0 : i32
    return %arg0, %c0_i32, %c0_i32_0 : i32, i32, i32
  }
  func.func @transform_1(%arg0: i32, %arg1: i32) -> (i32, i32) {
    %c0_i32 = arith.constant 0 : i32
    %c0_i32_0 = arith.constant 0 : i32
    %c0_i32_1 = arith.constant 0 : i32
    return %c0_i32, %c0_i32_0 : i32, i32
  }
  func.func @transform_2(%arg0: i32, %arg1: i32) -> (i32, i32) {
    %c0_i32 = arith.constant 0 : i32
    %c0_i32_0 = arith.constant 0 : i32
    %c0_i32_1 = arith.constant 0 : i32
    return %c0_i32, %c0_i32_0 : i32, i32
  }
  func.func @transform_3(%arg0: i32, %arg1: i32) -> (i32, i32) {
    %c0_i32 = arith.constant 0 : i32
    %c0_i32_0 = arith.constant 0 : i32
    %c0_i32_1 = arith.constant 0 : i32
    return %c0_i32, %c0_i32_0 : i32, i32
  }
  func.func @transform_4(%arg0: i32, %arg1: i32) -> (i32, i32) {
    %c0_i32 = arith.constant 0 : i32
    %c0_i32_0 = arith.constant 0 : i32
    %c0_i32_1 = arith.constant 0 : i32
    return %c0_i32, %c0_i32_0 : i32, i32
  }
  func.func @transform_5(%arg0: i32, %arg1: i32) -> (i32, i32) {
    %c0_i32 = arith.constant 0 : i32
    %c0_i32_0 = arith.constant 0 : i32
    %c0_i32_1 = arith.constant 0 : i32
    return %c0_i32, %c0_i32_0 : i32, i32
  }
  func.func @transform_6(%arg0: i32, %arg1: i32) -> (i32, i32) {
    %c0_i32 = arith.constant 0 : i32
    %c0_i32_0 = arith.constant 0 : i32
    %c0_i32_1 = arith.constant 0 : i32
    return %c0_i32, %c0_i32_0 : i32, i32
  }
  func.func @transform_7(%arg0: i32, %arg1: i32) -> (i32, i32) {
    %c0_i32 = arith.constant 0 : i32
    %c0_i32_0 = arith.constant 0 : i32
    %c0_i32_1 = arith.constant 0 : i32
    return %c0_i32, %c0_i32_0 : i32, i32
  }
  func.func @transform_8(%arg0: i32, %arg1: i32) -> (i32, i32) {
    %c0_i32 = arith.constant 0 : i32
    %c0_i32_0 = arith.constant 0 : i32
    %c0_i32_1 = arith.constant 0 : i32
    return %c0_i32, %c0_i32_0 : i32, i32
  }
  func.func @transform_9(%arg0: i32, %arg1: i32) -> (i32, i32, i32) {
    %c0_i32 = arith.constant 0 : i32
    %c0_i32_0 = arith.constant 0 : i32
    %c0_i32_1 = arith.constant 0 : i32
    return %arg1, %c0_i32, %c0_i32_0 : i32, i32, i32
  }
  func.func @transform_10(%arg0: i32, %arg1: i32) -> (i32, i32, i32) {
    %c0_i32 = arith.constant 0 : i32
    %c0_i32_0 = arith.constant 0 : i32
    %c0_i32_1 = arith.constant 0 : i32
    return %arg1, %c0_i32, %c0_i32_0 : i32, i32, i32
  }
  func.func @transform_11(%arg0: i32, %arg1: i32) -> (i32, i32, i32) {
    %c0_i32 = arith.constant 0 : i32
    %c0_i32_0 = arith.constant 0 : i32
    %c0_i32_1 = arith.constant 0 : i32
    return %arg1, %c0_i32, %c0_i32_0 : i32, i32, i32
  }
  func.func @transform_12(%arg0: i32, %arg1: i32) -> (i32, i32, i32) {
    %c0_i32 = arith.constant 0 : i32
    %c0_i32_0 = arith.constant 0 : i32
    %c0_i32_1 = arith.constant 0 : i32
    return %arg1, %c0_i32, %c0_i32_0 : i32, i32, i32
  }
  func.func @transform_13(%arg0: i32, %arg1: i32) -> (i32, i32, i32) {
    %c0_i32 = arith.constant 0 : i32
    %c0_i32_0 = arith.constant 0 : i32
    %c0_i32_1 = arith.constant 0 : i32
    return %arg1, %c0_i32, %c0_i32_0 : i32, i32, i32
  }
  func.func @transform_14(%arg0: i32, %arg1: i32) -> (i32, i32, i32) {
    %c0_i32 = arith.constant 0 : i32
    %c0_i32_0 = arith.constant 0 : i32
    %c0_i32_1 = arith.constant 0 : i32
    return %arg1, %c0_i32, %c0_i32_0 : i32, i32, i32
  }
  func.func @transform_15(%arg0: i32, %arg1: i32) -> (i32, i32, i32) {
    %c0_i32 = arith.constant 0 : i32
    %c0_i32_0 = arith.constant 0 : i32
    %c0_i32_1 = arith.constant 0 : i32
    return %arg1, %c0_i32, %c0_i32_0 : i32, i32, i32
  }
  func.func @transform_16(%arg0: i32, %arg1: i32) -> (i32, i32) {
    %c0_i32 = arith.constant 0 : i32
    %c0_i32_0 = arith.constant 0 : i32
    %c0_i32_1 = arith.constant 0 : i32
    return %c0_i32, %c0_i32_0 : i32, i32
  }
  func.func @transform_17(%arg0: i32, %arg1: i32) -> (i32, i32) {
    %c0_i32 = arith.constant 0 : i32
    %c0_i32_0 = arith.constant 0 : i32
    %c0_i32_1 = arith.constant 0 : i32
    return %c0_i32, %c0_i32_0 : i32, i32
  }
  func.func @transform_18(%arg0: i32, %arg1: i32) -> (i32, i32) {
    %c0_i32 = arith.constant 0 : i32
    %c0_i32_0 = arith.constant 0 : i32
    %c0_i32_1 = arith.constant 0 : i32
    return %c0_i32, %c0_i32_0 : i32, i32
  }
  func.func @transform_19(%arg0: i32, %arg1: i32) -> (i32, i32) {
    %c0_i32 = arith.constant 0 : i32
    %c0_i32_0 = arith.constant 0 : i32
    %c0_i32_1 = arith.constant 0 : i32
    return %c0_i32, %c0_i32_0 : i32, i32
  }
  func.func @transform_20(%arg0: i32, %arg1: i32) -> (i32, i32, i32) {
    %c0_i32 = arith.constant 0 : i32
    %c0_i32_0 = arith.constant 0 : i32
    %c0_i32_1 = arith.constant 0 : i32
    return %arg0, %c0_i32, %c0_i32_0 : i32, i32, i32
  }
}

</mosaic_0001>

<llo_original>
// kernel: vit_forward.1
$region0: #{vit_forward.1}
  #allocation0 [shape = 'u32[]', space=smem, size = 0x4, offset = 0x4, fixed_abs, tag = 'smem constant byte address 0x4 - core index']
  #allocation1 [shape = 'u32[72,128]{1,0:T(1,128)}', space=vmem, size = 0x9000, scoped, tag = 'internal scratch']
  #allocation2 [shape = 'f32[24,128]{1,0:T(8,128)}', space=vmem, size = 0x3000, scoped, tag = 'scratch operand']
  #allocation3 [shape = 'f32[24,128]{1,0:T(8,128)}', space=vmem, size = 0x3000, scoped, tag = 'scratch operand']
  %s0 = inlined_call_operand.vmem [shape: f32[2,16,240], index: 0, kind: input, shape index: {}]
  %s1 = inlined_call_operand.vmem [shape: f32[1,240], index: 1, kind: input, shape index: {}]
  %s2 = inlined_call_operand.vmem [shape: f32[1,240], index: 2, kind: input, shape index: {}]
  %s3 = inlined_call_operand.vmem [shape: f32[240,128], index: 3, kind: input, shape index: {}]
  %s4 = inlined_call_operand.vmem [shape: f32[1,128], index: 4, kind: input, shape index: {}]
  %s5 = inlined_call_operand.vmem [shape: f32[1,128], index: 5, kind: input, shape index: {}]
  %s6 = inlined_call_operand.vmem [shape: f32[17,128], index: 6, kind: input, shape index: {}]
  %s7 = inlined_call_operand.vmem [shape: f32[1,128], index: 7, kind: input, shape index: {}]
  %s8 = inlined_call_operand.vmem [shape: f32[1,128], index: 8, kind: input, shape index: {}]
  %s9 = inlined_call_operand.vmem [shape: f32[2,128,384], index: 9, kind: input, shape index: {}]
  %s10 = inlined_call_operand.vmem [shape: f32[2,128,128], index: 10, kind: input, shape index: {}]
  %s11 = inlined_call_operand.vmem [shape: f32[2,1,128], index: 11, kind: input, shape index: {}]
  %s12 = inlined_call_operand.vmem [shape: f32[2,128,256], index: 12, kind: input, shape index: {}]
  %s13 = inlined_call_operand.vmem [shape: f32[2,1,256], index: 13, kind: input, shape index: {}]
  %s14 = inlined_call_operand.vmem [shape: f32[2,256,128], index: 14, kind: input, shape index: {}]
  %s15 = inlined_call_operand.vmem [shape: f32[2,1,128], index: 15, kind: input, shape index: {}]
  %s16 = inlined_call_operand.vmem [shape: f32[1,128], index: 16, kind: input, shape index: {}]
  %s17 = inlined_call_operand.vmem [shape: f32[1,128], index: 17, kind: input, shape index: {}]
  %s18 = inlined_call_operand.vmem [shape: f32[128,10], index: 18, kind: input, shape index: {}]
  %s19 = inlined_call_operand.vmem [shape: f32[1,10], index: 19, kind: input, shape index: {}]
  %s20 = inlined_call_operand.hbm [shape: f32[2,1,10], index: 20, kind: output, shape index: {}]
  %s21 = sld [smem:[#allocation0]]
  $region121: #{vit_forward.1} parent=0
    _
  %s23 = ssub.s32 1, %s21
  %s24 = scalar_select 0, %s23, %s21
  $region1: #{vit_forward.1} parent=0
    #allocation4 [shape = 'u8[1024]{0}', space=vmem, size = 0x400, scoped, tag = 'output window, operand 0']
    #allocation5 [shape = 's32[2]{0}', space=sflag, size = 0x8, scoped, tag = 'scoped memory for vit_forward.1']
    %25 = vsyncpa [#allocation5], 0
    %s26 = scalar_lea.sflag [#allocation5], 1
    %27 = vsyncpa %s26, 0
    loop: start=0, step=1, limit=6
    $region2: #{vit_forward.1} parent=1 // loop_pre_header
      _
    $region3: #{vit_forward.1} parent=1 // loop_header
      %s29 = sphi 0, %s33
      %p30 = scmp.ge.s32.totalorder %s29, 6
      %s36 = sphi 0, %s48
      %s37 = sphi 0, %s44
      %s38 = sphi 0, %s36
      %s39 = sphi 0, %s37
      %s40 = sphi 0, %s38
      %s41 = sphi 0, %s39
      %s51 = sphi 0, %s53
      %s54 = sphi 0, %s51
      %s55 = sphi 0, %s54
      %s71 = sphi 0, %s55
      %s75 = sphi 0, %s75
      %s77 = sphi 0, %s75
      %s78 = sphi 0, %s77
      %s92 = sphi 0, %s78
      %s96 = sphi 0, %s96
      %s98 = sphi 0, %s96
      %s99 = sphi 0, %s98
      %s113 = sphi 0, %s99
      %s117 = sphi 0, %s117
      %s119 = sphi 0, %s117
      %s120 = sphi 0, %s119
      %s134 = sphi 0, %s120
      %s138 = sphi 0, %s138
      %s140 = sphi 0, %s138
      %s141 = sphi 0, %s140
      %s155 = sphi 0, %s141
      %s159 = sphi 0, %s159
      %s161 = sphi 0, %s159
      %s162 = sphi 0, %s161
      %s176 = sphi 0, %s162
      %s180 = sphi 0, %s180
      %s182 = sphi 0, %s180
      %s183 = sphi 0, %s182
      %s197 = sphi 0, %s183
      %s201 = sphi 0, %s201
      %s203 = sphi 0, %s201
      %s204 = sphi 0, %s203
      %s218 = sphi 0, %s204
      %s222 = sphi 0, %s222
      %s224 = sphi 0, %s222
      %s225 = sphi 0, %s224
      %s239 = sphi 0, %s225
      %s245 = sphi 0, %s247
      %s248 = sphi 0, %s245
      %s249 = sphi 0, %s248
      %s265 = sphi 0, %s249
      %s271 = sphi 0, %s273
      %s274 = sphi 0, %s271
      %s275 = sphi 0, %s274
      %s291 = sphi 0, %s275
      %s297 = sphi 0, %s299
      %s300 = sphi 0, %s297
      %s301 = sphi 0, %s300
      %s317 = sphi 0, %s301
      %s323 = sphi 0, %s325
      %s326 = sphi 0, %s323
      %s327 = sphi 0, %s326
      %s343 = sphi 0, %s327
      %s349 = sphi 0, %s351
      %s352 = sphi 0, %s349
      %s353 = sphi 0, %s352
      %s369 = sphi 0, %s353
      %s375 = sphi 0, %s377
      %s378 = sphi 0, %s375
      %s379 = sphi 0, %s378
      %s395 = sphi 0, %s379
      %s401 = sphi 0, %s403
      %s404 = sphi 0, %s401
      %s405 = sphi 0, %s404
      %s421 = sphi 0, %s405
      %s425 = sphi 0, %s425
      %s427 = sphi 0, %s425
      %s428 = sphi 0, %s427
      %s442 = sphi 0, %s428
      %s446 = sphi 0, %s446
      %s448 = sphi 0, %s446
      %s449 = sphi 0, %s448
      %s463 = sphi 0, %s449
      %s467 = sphi 0, %s467
      %s469 = sphi 0, %s467
      %s470 = sphi 0, %s469
      %s484 = sphi 0, %s470
      %s488 = sphi 0, %s488
      %s490 = sphi 0, %s488
      %s491 = sphi 0, %s490
      %s505 = sphi 0, %s491
      %s511 = sphi 0, %s513
      %s514 = sphi 0, %s511
      %s515 = sphi 0, %s514
      %s531 = sphi 0, %s515
    $region4: #{vit_forward.1} parent=1 // loop_header_branch
      %32 = sbr.rel (%p30) target = $region8
    $region5: #{vit_forward.1} parent=1 // loop_body
      %s34 = ssub.s32 %s29, 1
      %s35 = ssub.s32 %s29, 2
      %s42 = sadd.s32 1, %s37
      %p43 = scmp.ge.s32.totalorder %s42, 2
      %s44 = scalar_select %p43, 0, %s42
      %s45 = sadd.s32 1, %s36
      %s46 = scalar_select %p43, %s45, %s36
      %p47 = scmp.ge.s32.totalorder %s46, 2
      %s48 = scalar_select %p47, 0, %s46
      %s49 = ssub.s32 %s36, %s48
      %p50 = scmp.eq.s32.totalorder %s49, 0
      %s52 = sadd.s32 %s51, 1
      %s53 = scalar_select %p50, %s51, %s52
      %p56 = pneg %p50
      %p57 = scmp.eq.s32.totalorder %s29, 3
      %p58 = por %p56, %p57
      %p59 = scmp.ne.s32.totalorder %s51, %s54
      %p60 = scmp.eq.s32.totalorder %s29, 0
      %p61 = por %p59, %p60
      %p62 = scmp.ne.s32.totalorder %s51, %s54
      %p63 = scmp.eq.s32.totalorder %s34, 3
      %p64 = por %p62, %p63
      %p65 = scmp.ne.s32.totalorder %s54, %s55
      %p66 = scmp.eq.s32.totalorder %s34, 0
      %p67 = por %p65, %p66
      %p68 = scmp.ne.s32.totalorder %s54, %s55
      %p69 = scmp.eq.s32.totalorder %s35, 3
      %p70 = por %p68, %p69
      %p72 = scmp.ne.s32.totalorder %s55, %s71
      %p73 = scmp.eq.s32.totalorder %s35, 0
      %p74 = por %p72, %p73
      %s76 = sadd.s32 %s75, 1
      %p79 = scmp.eq.s32.totalorder %s29, 3
      %p80 = scmp.ne.s32.totalorder %s75, %s77
      %p81 = scmp.eq.s32.totalorder %s29, 0
      %p82 = por %p80, %p81
      %p83 = scmp.ne.s32.totalorder %s75, %s77
      %p84 = scmp.eq.s32.totalorder %s34, 3
      %p85 = por %p83, %p84
      %p86 = scmp.ne.s32.totalorder %s77, %s78
      %p87 = scmp.eq.s32.totalorder %s34, 0
      %p88 = por %p86, %p87
      %p89 = scmp.ne.s32.totalorder %s77, %s78
      %p90 = scmp.eq.s32.totalorder %s35, 3
      %p91 = por %p89, %p90
      %p93 = scmp.ne.s32.totalorder %s78, %s92
      %p94 = scmp.eq.s32.totalorder %s35, 0
      %p95 = por %p93, %p94
      %s97 = sadd.s32 %s96, 1
      %p100 = scmp.eq.s32.totalorder %s29, 3
      %p101 = scmp.ne.s32.totalorder %s96, %s98
      %p102 = scmp.eq.s32.totalorder %s29, 0
      %p103 = por %p101, %p102
      %p104 = scmp.ne.s32.totalorder %s96, %s98
      %p105 = scmp.eq.s32.totalorder %s34, 3
      %p106 = por %p104, %p105
      %p107 = scmp.ne.s32.totalorder %s98, %s99
      %p108 = scmp.eq.s32.totalorder %s34, 0
      %p109 = por %p107, %p108
      %p110 = scmp.ne.s32.totalorder %s98, %s99
      %p111 = scmp.eq.s32.totalorder %s35, 3
      %p112 = por %p110, %p111
      %p114 = scmp.ne.s32.totalorder %s99, %s113
      %p115 = scmp.eq.s32.totalorder %s35, 0
      %p116 = por %p114, %p115
      %s118 = sadd.s32 %s117, 1
      %p121 = scmp.eq.s32.totalorder %s29, 3
      %p122 = scmp.ne.s32.totalorder %s117, %s119
      %p123 = scmp.eq.s32.totalorder %s29, 0
      %p124 = por %p122, %p123
      %p125 = scmp.ne.s32.totalorder %s117, %s119
      %p126 = scmp.eq.s32.totalorder %s34, 3
      %p127 = por %p125, %p126
      %p128 = scmp.ne.s32.totalorder %s119, %s120
      %p129 = scmp.eq.s32.totalorder %s34, 0
      %p130 = por %p128, %p129
      %p131 = scmp.ne.s32.totalorder %s119, %s120
      %p132 = scmp.eq.s32.totalorder %s35, 3
      %p133 = por %p131, %p132
      %p135 = scmp.ne.s32.totalorder %s120, %s134
      %p136 = scmp.eq.s32.totalorder %s35, 0
      %p137 = por %p135, %p136
      %s139 = sadd.s32 %s138, 1
      %p142 = scmp.eq.s32.totalorder %s29, 3
      %p143 = scmp.ne.s32.totalorder %s138, %s140
      %p144 = scmp.eq.s32.totalorder %s29, 0
      %p145 = por %p143, %p144
      %p146 = scmp.ne.s32.totalorder %s138, %s140
      %p147 = scmp.eq.s32.totalorder %s34, 3
      %p148 = por %p146, %p147
      %p149 = scmp.ne.s32.totalorder %s140, %s141
      %p150 = scmp.eq.s32.totalorder %s34, 0
      %p151 = por %p149, %p150
      %p152 = scmp.ne.s32.totalorder %s140, %s141
      %p153 = scmp.eq.s32.totalorder %s35, 3
      %p154 = por %p152, %p153
      %p156 = scmp.ne.s32.totalorder %s141, %s155
      %p157 = scmp.eq.s32.totalorder %s35, 0
      %p158 = por %p156, %p157
      %s160 = sadd.s32 %s159, 1
      %p163 = scmp.eq.s32.totalorder %s29, 3
      %p164 = scmp.ne.s32.totalorder %s159, %s161
      %p165 = scmp.eq.s32.totalorder %s29, 0
      %p166 = por %p164, %p165
      %p167 = scmp.ne.s32.totalorder %s159, %s161
      %p168 = scmp.eq.s32.totalorder %s34, 3
      %p169 = por %p167, %p168
      %p170 = scmp.ne.s32.totalorder %s161, %s162
      %p171 = scmp.eq.s32.totalorder %s34, 0
      %p172 = por %p170, %p171
      %p173 = scmp.ne.s32.totalorder %s161, %s162
      %p174 = scmp.eq.s32.totalorder %s35, 3
      %p175 = por %p173, %p174
      %p177 = scmp.ne.s32.totalorder %s162, %s176
      %p178 = scmp.eq.s32.totalorder %s35, 0
      %p179 = por %p177, %p178
      %s181 = sadd.s32 %s180, 1
      %p184 = scmp.eq.s32.totalorder %s29, 3
      %p185 = scmp.ne.s32.totalorder %s180, %s182
      %p186 = scmp.eq.s32.totalorder %s29, 0
      %p187 = por %p185, %p186
      %p188 = scmp.ne.s32.totalorder %s180, %s182
      %p189 = scmp.eq.s32.totalorder %s34, 3
      %p190 = por %p188, %p189
      %p191 = scmp.ne.s32.totalorder %s182, %s183
      %p192 = scmp.eq.s32.totalorder %s34, 0
      %p193 = por %p191, %p192
      %p194 = scmp.ne.s32.totalorder %s182, %s183
      %p195 = scmp.eq.s32.totalorder %s35, 3
      %p196 = por %p194, %p195
      %p198 = scmp.ne.s32.totalorder %s183, %s197
      %p199 = scmp.eq.s32.totalorder %s35, 0
      %p200 = por %p198, %p199
      %s202 = sadd.s32 %s201, 1
      %p205 = scmp.eq.s32.totalorder %s29, 3
      %p206 = scmp.ne.s32.totalorder %s201, %s203
      %p207 = scmp.eq.s32.totalorder %s29, 0
      %p208 = por %p206, %p207
      %p209 = scmp.ne.s32.totalorder %s201, %s203
      %p210 = scmp.eq.s32.totalorder %s34, 3
      %p211 = por %p209, %p210
      %p212 = scmp.ne.s32.totalorder %s203, %s204
      %p213 = scmp.eq.s32.totalorder %s34, 0
      %p214 = por %p212, %p213
      %p215 = scmp.ne.s32.totalorder %s203, %s204
      %p216 = scmp.eq.s32.totalorder %s35, 3
      %p217 = por %p215, %p216
      %p219 = scmp.ne.s32.totalorder %s204, %s218
      %p220 = scmp.eq.s32.totalorder %s35, 0
      %p221 = por %p219, %p220
      %s223 = sadd.s32 %s222, 1
      %p226 = scmp.eq.s32.totalorder %s29, 3
      %p227 = scmp.ne.s32.totalorder %s222, %s224
      %p228 = scmp.eq.s32.totalorder %s29, 0
      %p229 = por %p227, %p228
      %p230 = scmp.ne.s32.totalorder %s222, %s224
      %p231 = scmp.eq.s32.totalorder %s34, 3
      %p232 = por %p230, %p231
      %p233 = scmp.ne.s32.totalorder %s224, %s225
      %p234 = scmp.eq.s32.totalorder %s34, 0
      %p235 = por %p233, %p234
      %p236 = scmp.ne.s32.totalorder %s224, %s225
      %p237 = scmp.eq.s32.totalorder %s35, 3
      %p238 = por %p236, %p237
      %p240 = scmp.ne.s32.totalorder %s225, %s239
      %p241 = scmp.eq.s32.totalorder %s35, 0
      %p242 = por %p240, %p241
      %s243 = ssub.s32 %s37, %s44
      %p244 = scmp.eq.s32.totalorder %s243, 0
      %s246 = sadd.s32 %s245, 1
      %s247 = scalar_select %p244, %s245, %s246
      %p250 = pneg %p244
      %p251 = scmp.eq.s32.totalorder %s29, 3
      %p252 = por %p250, %p251
      %p253 = scmp.ne.s32.totalorder %s245, %s248
      %p254 = scmp.eq.s32.totalorder %s29, 0
      %p255 = por %p253, %p254
      %p256 = scmp.ne.s32.totalorder %s245, %s248
      %p257 = scmp.eq.s32.totalorder %s34, 3
      %p258 = por %p256, %p257
      %p259 = scmp.ne.s32.totalorder %s248, %s249
      %p260 = scmp.eq.s32.totalorder %s34, 0
      %p261 = por %p259, %p260
      %p262 = scmp.ne.s32.totalorder %s248, %s249
      %p263 = scmp.eq.s32.totalorder %s35, 3
      %p264 = por %p262, %p263
      %p266 = scmp.ne.s32.totalorder %s249, %s265
      %p267 = scmp.eq.s32.totalorder %s35, 0
      %p268 = por %p266, %p267
      %s269 = ssub.s32 %s37, %s44
      %p270 = scmp.eq.s32.totalorder %s269, 0
      %s272 = sadd.s32 %s271, 1
      %s273 = scalar_select %p270, %s271, %s272
      %p276 = pneg %p270
      %p277 = scmp.eq.s32.totalorder %s29, 3
      %p278 = por %p276, %p277
      %p279 = scmp.ne.s32.totalorder %s271, %s274
      %p280 = scmp.eq.s32.totalorder %s29, 0
      %p281 = por %p279, %p280
      %p282 = scmp.ne.s32.totalorder %s271, %s274
      %p283 = scmp.eq.s32.totalorder %s34, 3
      %p284 = por %p282, %p283
      %p285 = scmp.ne.s32.totalorder %s274, %s275
      %p286 = scmp.eq.s32.totalorder %s34, 0
      %p287 = por %p285, %p286
      %p288 = scmp.ne.s32.totalorder %s274, %s275
      %p289 = scmp.eq.s32.totalorder %s35, 3
      %p290 = por %p288, %p289
      %p292 = scmp.ne.s32.totalorder %s275, %s291
      %p293 = scmp.eq.s32.totalorder %s35, 0
      %p294 = por %p292, %p293
      %s295 = ssub.s32 %s37, %s44
      %p296 = scmp.eq.s32.totalorder %s295, 0
      %s298 = sadd.s32 %s297, 1
      %s299 = scalar_select %p296, %s297, %s298
      %p302 = pneg %p296
      %p303 = scmp.eq.s32.totalorder %s29, 3
      %p304 = por %p302, %p303
      %p305 = scmp.ne.s32.totalorder %s297, %s300
      %p306 = scmp.eq.s32.totalorder %s29, 0
      %p307 = por %p305, %p306
      %p308 = scmp.ne.s32.totalorder %s297, %s300
      %p309 = scmp.eq.s32.totalorder %s34, 3
      %p310 = por %p308, %p309
      %p311 = scmp.ne.s32.totalorder %s300, %s301
      %p312 = scmp.eq.s32.totalorder %s34, 0
      %p313 = por %p311, %p312
      %p314 = scmp.ne.s32.totalorder %s300, %s301
      %p315 = scmp.eq.s32.totalorder %s35, 3
      %p316 = por %p314, %p315
      %p318 = scmp.ne.s32.totalorder %s301, %s317
      %p319 = scmp.eq.s32.totalorder %s35, 0
      %p320 = por %p318, %p319
      %s321 = ssub.s32 %s37, %s44
      %p322 = scmp.eq.s32.totalorder %s321, 0
      %s324 = sadd.s32 %s323, 1
      %s325 = scalar_select %p322, %s323, %s324
      %p328 = pneg %p322
      %p329 = scmp.eq.s32.totalorder %s29, 3
      %p330 = por %p328, %p329
      %p331 = scmp.ne.s32.totalorder %s323, %s326
      %p332 = scmp.eq.s32.totalorder %s29, 0
      %p333 = por %p331, %p332
      %p334 = scmp.ne.s32.totalorder %s323, %s326
      %p335 = scmp.eq.s32.totalorder %s34, 3
      %p336 = por %p334, %p335
      %p337 = scmp.ne.s32.totalorder %s326, %s327
      %p338 = scmp.eq.s32.totalorder %s34, 0
      %p339 = por %p337, %p338
      %p340 = scmp.ne.s32.totalorder %s326, %s327
      %p341 = scmp.eq.s32.totalorder %s35, 3
      %p342 = por %p340, %p341
      %p344 = scmp.ne.s32.totalorder %s327, %s343
      %p345 = scmp.eq.s32.totalorder %s35, 0
      %p346 = por %p344, %p345
      %s347 = ssub.s32 %s37, %s44
      %p348 = scmp.eq.s32.totalorder %s347, 0
      %s350 = sadd.s32 %s349, 1
      %s351 = scalar_select %p348, %s349, %s350
      %p354 = pneg %p348
      %p355 = scmp.eq.s32.totalorder %s29, 3
      %p356 = por %p354, %p355
      %p357 = scmp.ne.s32.totalorder %s349, %s352
      %p358 = scmp.eq.s32.totalorder %s29, 0
      %p359 = por %p357, %p358
      %p360 = scmp.ne.s32.totalorder %s349, %s352
      %p361 = scmp.eq.s32.totalorder %s34, 3
      %p362 = por %p360, %p361
      %p363 = scmp.ne.s32.totalorder %s352, %s353
      %p364 = scmp.eq.s32.totalorder %s34, 0
      %p365 = por %p363, %p364
      %p366 = scmp.ne.s32.totalorder %s352, %s353
      %p367 = scmp.eq.s32.totalorder %s35, 3
      %p368 = por %p366, %p367
      %p370 = scmp.ne.s32.totalorder %s353, %s369
      %p371 = scmp.eq.s32.totalorder %s35, 0
      %p372 = por %p370, %p371
      %s373 = ssub.s32 %s37, %s44
      %p374 = scmp.eq.s32.totalorder %s373, 0
      %s376 = sadd.s32 %s375, 1
      %s377 = scalar_select %p374, %s375, %s376
      %p380 = pneg %p374
      %p381 = scmp.eq.s32.totalorder %s29, 3
      %p382 = por %p380, %p381
      %p383 = scmp.ne.s32.totalorder %s375, %s378
      %p384 = scmp.eq.s32.totalorder %s29, 0
      %p385 = por %p383, %p384
      %p386 = scmp.ne.s32.totalorder %s375, %s378
      %p387 = scmp.eq.s32.totalorder %s34, 3
      %p388 = por %p386, %p387
      %p389 = scmp.ne.s32.totalorder %s378, %s379
      %p390 = scmp.eq.s32.totalorder %s34, 0
      %p391 = por %p389, %p390
      %p392 = scmp.ne.s32.totalorder %s378, %s379
      %p393 = scmp.eq.s32.totalorder %s35, 3
      %p394 = por %p392, %p393
      %p396 = scmp.ne.s32.totalorder %s379, %s395
      %p397 = scmp.eq.s32.totalorder %s35, 0
      %p398 = por %p396, %p397
      %s399 = ssub.s32 %s37, %s44
      %p400 = scmp.eq.s32.totalorder %s399, 0
      %s402 = sadd.s32 %s401, 1
      %s403 = scalar_select %p400, %s401, %s402
      %p406 = pneg %p400
      %p407 = scmp.eq.s32.totalorder %s29, 3
      %p408 = por %p406, %p407
      %p409 = scmp.ne.s32.totalorder %s401, %s404
      %p410 = scmp.eq.s32.totalorder %s29, 0
      %p411 = por %p409, %p410
      %p412 = scmp.ne.s32.totalorder %s401, %s404
      %p413 = scmp.eq.s32.totalorder %s34, 3
      %p414 = por %p412, %p413
      %p415 = scmp.ne.s32.totalorder %s404, %s405
      %p416 = scmp.eq.s32.totalorder %s34, 0
      %p417 = por %p415, %p416
      %p418 = scmp.ne.s32.totalorder %s404, %s405
      %p419 = scmp.eq.s32.totalorder %s35, 3
      %p420 = por %p418, %p419
      %p422 = scmp.ne.s32.totalorder %s405, %s421
      %p423 = scmp.eq.s32.totalorder %s35, 0
      %p424 = por %p422, %p423
      %s426 = sadd.s32 %s425, 1
      %p429 = scmp.eq.s32.totalorder %s29, 3
      %p430 = scmp.ne.s32.totalorder %s425, %s427
      %p431 = scmp.eq.s32.totalorder %s29, 0
      %p432 = por %p430, %p431
      %p433 = scmp.ne.s32.totalorder %s425, %s427
      %p434 = scmp.eq.s32.totalorder %s34, 3
      %p435 = por %p433, %p434
      %p436 = scmp.ne.s32.totalorder %s427, %s428
      %p437 = scmp.eq.s32.totalorder %s34, 0
      %p438 = por %p436, %p437
      %p439 = scmp.ne.s32.totalorder %s427, %s428
      %p440 = scmp.eq.s32.totalorder %s35, 3
      %p441 = por %p439, %p440
      %p443 = scmp.ne.s32.totalorder %s428, %s442
      %p444 = scmp.eq.s32.totalorder %s35, 0
      %p445 = por %p443, %p444
      %s447 = sadd.s32 %s446, 1
      %p450 = scmp.eq.s32.totalorder %s29, 3
      %p451 = scmp.ne.s32.totalorder %s446, %s448
      %p452 = scmp.eq.s32.totalorder %s29, 0
      %p453 = por %p451, %p452
      %p454 = scmp.ne.s32.totalorder %s446, %s448
      %p455 = scmp.eq.s32.totalorder %s34, 3
      %p456 = por %p454, %p455
      %p457 = scmp.ne.s32.totalorder %s448, %s449
      %p458 = scmp.eq.s32.totalorder %s34, 0
      %p459 = por %p457, %p458
      %p460 = scmp.ne.s32.totalorder %s448, %s449
      %p461 = scmp.eq.s32.totalorder %s35, 3
      %p462 = por %p460, %p461
      %p464 = scmp.ne.s32.totalorder %s449, %s463
      %p465 = scmp.eq.s32.totalorder %s35, 0
      %p466 = por %p464, %p465
      %s468 = sadd.s32 %s467, 1
      %p471 = scmp.eq.s32.totalorder %s29, 3
      %p472 = scmp.ne.s32.totalorder %s467, %s469
      %p473 = scmp.eq.s32.totalorder %s29, 0
      %p474 = por %p472, %p473
      %p475 = scmp.ne.s32.totalorder %s467, %s469
      %p476 = scmp.eq.s32.totalorder %s34, 3
      %p477 = por %p475, %p476
      %p478 = scmp.ne.s32.totalorder %s469, %s470
      %p479 = scmp.eq.s32.totalorder %s34, 0
      %p480 = por %p478, %p479
      %p481 = scmp.ne.s32.totalorder %s469, %s470
      %p482 = scmp.eq.s32.totalorder %s35, 3
      %p483 = por %p481, %p482
      %p485 = scmp.ne.s32.totalorder %s470, %s484
      %p486 = scmp.eq.s32.totalorder %s35, 0
      %p487 = por %p485, %p486
      %s489 = sadd.s32 %s488, 1
      %p492 = scmp.eq.s32.totalorder %s29, 3
      %p493 = scmp.ne.s32.totalorder %s488, %s490
      %p494 = scmp.eq.s32.totalorder %s29, 0
      %p495 = por %p493, %p494
      %p496 = scmp.ne.s32.totalorder %s488, %s490
      %p497 = scmp.eq.s32.totalorder %s34, 3
      %p498 = por %p496, %p497
      %p499 = scmp.ne.s32.totalorder %s490, %s491
      %p500 = scmp.eq.s32.totalorder %s34, 0
      %p501 = por %p499, %p500
      %p502 = scmp.ne.s32.totalorder %s490, %s491
      %p503 = scmp.eq.s32.totalorder %s35, 3
      %p504 = por %p502, %p503
      %p506 = scmp.ne.s32.totalorder %s491, %s505
      %p507 = scmp.eq.s32.totalorder %s35, 0
      %p508 = por %p506, %p507
      %s509 = ssub.s32 %s36, %s48
      %p510 = scmp.eq.s32.totalorder %s509, 0
      %s512 = sadd.s32 %s511, 1
      %s513 = scalar_select %p510, %s511, %s512
      %p516 = pneg %p510
      %p517 = scmp.eq.s32.totalorder %s29, 3
      %p518 = por %p516, %p517
      %p519 = scmp.ne.s32.totalorder %s511, %s514
      %p520 = scmp.eq.s32.totalorder %s29, 0
      %p521 = por %p519, %p520
      %p522 = scmp.ne.s32.totalorder %s511, %s514
      %p523 = scmp.eq.s32.totalorder %s34, 3
      %p524 = por %p522, %p523
      %p525 = scmp.ne.s32.totalorder %s514, %s515
      %p526 = scmp.eq.s32.totalorder %s34, 0
      %p527 = por %p525, %p526
      %p528 = scmp.ne.s32.totalorder %s514, %s515
      %p529 = scmp.eq.s32.totalorder %s35, 3
      %p530 = por %p528, %p529
      %p532 = scmp.ne.s32.totalorder %s515, %s531
      %p533 = scmp.eq.s32.totalorder %s35, 0
      %p534 = por %p532, %p533
      %p535 = scmp.le.s32.totalorder 1, %s29
      %p536 = scmp.lt.s32.totalorder %s29, 5
      %p537 = pnand %p535, %p536
      %p538 = pneg %p537
      // Predicated region
      $region9: #{vit_forward.1} parent=5 // pred_check
        _
      $region10: #{vit_forward.1} parent=5 // pred_check_branch
        %540 = sbr.rel (%p537) target = $region12
      $region11: #{vit_forward.1} parent=5 // pred_region
        %s541 = ssub.s32 %s29, 1
        // Predicated region
        $region13: #{vit_forward.1} parent=11 // pred_check
          %p542 = pneg %p88
        $region14: #{vit_forward.1} parent=11 // pred_check_branch
          %544 = sbr.rel (%p542) target = $region16
        $region15: #{vit_forward.1} parent=11 // pred_region
          _
        $region16: #{vit_forward.1} parent=11 // pred_fallthru
          _
        // Predicated region
        $region17: #{vit_forward.1} parent=11 // pred_check
          %p545 = pneg %p109
        $region18: #{vit_forward.1} parent=11 // pred_check_branch
          %547 = sbr.rel (%p545) target = $region20
        $region19: #{vit_forward.1} parent=11 // pred_region
          _
        $region20: #{vit_forward.1} parent=11 // pred_fallthru
          _
        // Predicated region
        $region21: #{vit_forward.1} parent=11 // pred_check
          %p548 = pneg %p130
        $region22: #{vit_forward.1} parent=11 // pred_check_branch
          %550 = sbr.rel (%p548) target = $region24
        $region23: #{vit_forward.1} parent=11 // pred_region
          _
        $region24: #{vit_forward.1} parent=11 // pred_fallthru
          _
        // Predicated region
        $region25: #{vit_forward.1} parent=11 // pred_check
          %p551 = pneg %p151
        $region26: #{vit_forward.1} parent=11 // pred_check_branch
          %553 = sbr.rel (%p551) target = $region28
        $region27: #{vit_forward.1} parent=11 // pred_region
          _
        $region28: #{vit_forward.1} parent=11 // pred_fallthru
          _
        // Predicated region
        $region29: #{vit_forward.1} parent=11 // pred_check
          %p554 = pneg %p172
        $region30: #{vit_forward.1} parent=11 // pred_check_branch
          %556 = sbr.rel (%p554) target = $region32
        $region31: #{vit_forward.1} parent=11 // pred_region
          _
        $region32: #{vit_forward.1} parent=11 // pred_fallthru
          _
        // Predicated region
        $region33: #{vit_forward.1} parent=11 // pred_check
          %p557 = pneg %p193
        $region34: #{vit_forward.1} parent=11 // pred_check_branch
          %559 = sbr.rel (%p557) target = $region36
        $region35: #{vit_forward.1} parent=11 // pred_region
          _
        $region36: #{vit_forward.1} parent=11 // pred_fallthru
          _
        // Predicated region
        $region37: #{vit_forward.1} parent=11 // pred_check
          %p560 = pneg %p214
        $region38: #{vit_forward.1} parent=11 // pred_check_branch
          %562 = sbr.rel (%p560) target = $region40
        $region39: #{vit_forward.1} parent=11 // pred_region
          _
        $region40: #{vit_forward.1} parent=11 // pred_fallthru
          _
        // Predicated region
        $region41: #{vit_forward.1} parent=11 // pred_check
          %p563 = pneg %p235
        $region42: #{vit_forward.1} parent=11 // pred_check_branch
          %565 = sbr.rel (%p563) target = $region44
        $region43: #{vit_forward.1} parent=11 // pred_region
          _
        $region44: #{vit_forward.1} parent=11 // pred_fallthru
          _
        // Predicated region
        $region45: #{vit_forward.1} parent=11 // pred_check
          %p566 = pneg %p438
        $region46: #{vit_forward.1} parent=11 // pred_check_branch
          %568 = sbr.rel (%p566) target = $region48
        $region47: #{vit_forward.1} parent=11 // pred_region
          _
        $region48: #{vit_forward.1} parent=11 // pred_fallthru
          _
        // Predicated region
        $region49: #{vit_forward.1} parent=11 // pred_check
          %p569 = pneg %p459
        $region50: #{vit_forward.1} parent=11 // pred_check_branch
          %571 = sbr.rel (%p569) target = $region52
        $region51: #{vit_forward.1} parent=11 // pred_region
          _
        $region52: #{vit_forward.1} parent=11 // pred_fallthru
          _
        // Predicated region
        $region53: #{vit_forward.1} parent=11 // pred_check
          %p572 = pneg %p480
        $region54: #{vit_forward.1} parent=11 // pred_check_branch
          %574 = sbr.rel (%p572) target = $region56
        $region55: #{vit_forward.1} parent=11 // pred_region
          _
        $region56: #{vit_forward.1} parent=11 // pred_fallthru
          _
        // Predicated region
        $region57: #{vit_forward.1} parent=11 // pred_check
          %p575 = pneg %p501
        $region58: #{vit_forward.1} parent=11 // pred_check_branch
          %577 = sbr.rel (%p575) target = $region60
        $region59: #{vit_forward.1} parent=11 // pred_region
          _
        $region60: #{vit_forward.1} parent=11 // pred_fallthru
          _
      $region12: #{vit_forward.1} parent=5 // pred_fallthru
        _
      %p578 = scmp.lt.s32.totalorder %s29, 4
      // Predicated region
      $region61: #{vit_forward.1} parent=5 // pred_check
        %p579 = pneg %p578
      $region62: #{vit_forward.1} parent=5 // pred_check_branch
        %581 = sbr.rel (%p579) target = $region64
      $region63: #{vit_forward.1} parent=5 // pred_region
        // Predicated region
        $region65: #{vit_forward.1} parent=63 // pred_check
          %p582 = pneg %p61
        $region66: #{vit_forward.1} parent=63 // pred_check_branch
          %584 = sbr.rel (%p582) target = $region68
        $region67: #{vit_forward.1} parent=63 // pred_region
          %p585 = scmp.lt.s32.totalorder %s36, 1
          %s586 = scalar_select %p585, %s36, 1
          %s587 = smul.addr %s586, 4
          %s588 = smul.addr %s587, 8
          %s589 = scalar_lea.vmem %s0, %s588
        $region68: #{vit_forward.1} parent=63 // pred_fallthru
          _
        // Predicated region
        $region69: #{vit_forward.1} parent=63 // pred_check
          %p590 = pneg %p255
        $region70: #{vit_forward.1} parent=63 // pred_check_branch
          %592 = sbr.rel (%p590) target = $region72
        $region71: #{vit_forward.1} parent=63 // pred_region
          %p593 = scmp.lt.s32.totalorder %s37, 1
          %s594 = scalar_select %p593, %s37, 1
          %s595 = smul.addr %s594, 48
          %s596 = smul.addr %s595, 8
          %s597 = scalar_lea.vmem %s9, %s596
        $region72: #{vit_forward.1} parent=63 // pred_fallthru
          _
        // Predicated region
        $region73: #{vit_forward.1} parent=63 // pred_check
          %p598 = pneg %p281
        $region74: #{vit_forward.1} parent=63 // pred_check_branch
          %600 = sbr.rel (%p598) target = $region76
        $region75: #{vit_forward.1} parent=63 // pred_region
          %p601 = scmp.lt.s32.totalorder %s37, 1
          %s602 = scalar_select %p601, %s37, 1
          %s603 = smul.addr %s602, 16
          %s604 = smul.addr %s603, 8
          %s605 = scalar_lea.vmem %s10, %s604
        $region76: #{vit_forward.1} parent=63 // pred_fallthru
          _
        // Predicated region
        $region77: #{vit_forward.1} parent=63 // pred_check
          %p606 = pneg %p307
        $region78: #{vit_forward.1} parent=63 // pred_check_branch
          %608 = sbr.rel (%p606) target = $region80
        $region79: #{vit_forward.1} parent=63 // pred_region
          %p609 = scmp.lt.s32.totalorder %s37, 1
          %s610 = scalar_select %p609, %s37, 1
          %s611 = scalar_lea.vmem %s11, %s610
        $region80: #{vit_forward.1} parent=63 // pred_fallthru
          _
        // Predicated region
        $region81: #{vit_forward.1} parent=63 // pred_check
          %p612 = pneg %p333
        $region82: #{vit_forward.1} parent=63 // pred_check_branch
          %614 = sbr.rel (%p612) target = $region84
        $region83: #{vit_forward.1} parent=63 // pred_region
          %p615 = scmp.lt.s32.totalorder %s37, 1
          %s616 = scalar_select %p615, %s37, 1
          %s617 = smul.addr %s616, 32
          %s618 = smul.addr %s617, 8
          %s619 = scalar_lea.vmem %s12, %s618
        $region84: #{vit_forward.1} parent=63 // pred_fallthru
          _
        // Predicated region
        $region85: #{vit_forward.1} parent=63 // pred_check
          %p620 = pneg %p359
        $region86: #{vit_forward.1} parent=63 // pred_check_branch
          %622 = sbr.rel (%p620) target = $region88
        $region87: #{vit_forward.1} parent=63 // pred_region
          %p623 = scmp.lt.s32.totalorder %s37, 1
          %s624 = scalar_select %p623, %s37, 1
          %s625 = smul.addr %s624, 2
          %s626 = scalar_lea.vmem %s13, %s625
        $region88: #{vit_forward.1} parent=63 // pred_fallthru
          _
        // Predicated region
        $region89: #{vit_forward.1} parent=63 // pred_check
          %p627 = pneg %p385
        $region90: #{vit_forward.1} parent=63 // pred_check_branch
          %629 = sbr.rel (%p627) target = $region92
        $region91: #{vit_forward.1} parent=63 // pred_region
          %p630 = scmp.lt.s32.totalorder %s37, 1
          %s631 = scalar_select %p630, %s37, 1
          %s632 = smul.addr %s631, 32
          %s633 = smul.addr %s632, 8
          %s634 = scalar_lea.vmem %s14, %s633
        $region92: #{vit_forward.1} parent=63 // pred_fallthru
          _
        // Predicated region
        $region93: #{vit_forward.1} parent=63 // pred_check
          %p635 = pneg %p411
        $region94: #{vit_forward.1} parent=63 // pred_check_branch
          %637 = sbr.rel (%p635) target = $region96
        $region95: #{vit_forward.1} parent=63 // pred_region
          %p638 = scmp.lt.s32.totalorder %s37, 1
          %s639 = scalar_select %p638, %s37, 1
          %s640 = scalar_lea.vmem %s15, %s639
        $region96: #{vit_forward.1} parent=63 // pred_fallthru
          _
      $region64: #{vit_forward.1} parent=5 // pred_fallthru
        _
      %p641 = scmp.le.s32.totalorder 1, %s29
      %p642 = scmp.lt.s32.totalorder %s29, 5
      %p643 = pnand %p641, %p642
      %p644 = pneg %p643
      // Predicated region
      $region97: #{vit_forward.1} parent=5 // pred_check
        _
      $region98: #{vit_forward.1} parent=5 // pred_check_branch
        %646 = sbr.rel (%p643) target = $region100
      $region99: #{vit_forward.1} parent=5 // pred_region
        %s647 = ssub.s32 %s29, 1
        %p648 = scmp.lt.s32.totalorder %s38, 1
        %s649 = scalar_select %p648, %s38, 1
        %s650 = smul.addr %s649, 4
        %s651 = smul.addr %s650, 8
        %s652 = scalar_lea.vmem %s0, %s651
        %p653 = pneg %p67
        %p654 = pneg %p64
        %p655 = pneg %p88
        %p656 = pneg %p85
        %p657 = pneg %p109
        %p658 = pneg %p106
        %p659 = pneg %p130
        %p660 = pneg %p127
        %p661 = pneg %p151
        %p662 = pneg %p148
        %p663 = pneg %p172
        %p664 = pneg %p169
        %p665 = pneg %p193
        %p666 = pneg %p190
        %p667 = pneg %p214
        %p668 = pneg %p211
        %p669 = pneg %p235
        %p670 = pneg %p232
        %p671 = scmp.lt.s32.totalorder %s39, 1
        %s672 = scalar_select %p671, %s39, 1
        %s673 = smul.addr %s672, 48
        %s674 = smul.addr %s673, 8
        %s675 = scalar_lea.vmem %s9, %s674
        %p676 = pneg %p261
        %p677 = pneg %p258
        %p678 = scmp.lt.s32.totalorder %s39, 1
        %s679 = scalar_select %p678, %s39, 1
        %s680 = smul.addr %s679, 16
        %s681 = smul.addr %s680, 8
        %s682 = scalar_lea.vmem %s10, %s681
        %p683 = pneg %p287
        %p684 = pneg %p284
        %p685 = scmp.lt.s32.totalorder %s39, 1
        %s686 = scalar_select %p685, %s39, 1
        %s687 = scalar_lea.vmem %s11, %s686
        %p688 = pneg %p313
        %p689 = pneg %p310
        %p690 = scmp.lt.s32.totalorder %s39, 1
        %s691 = scalar_select %p690, %s39, 1
        %s692 = smul.addr %s691, 32
        %s693 = smul.addr %s692, 8
        %s694 = scalar_lea.vmem %s12, %s693
        %p695 = pneg %p339
        %p696 = pneg %p336
        %p697 = scmp.lt.s32.totalorder %s39, 1
        %s698 = scalar_select %p697, %s39, 1
        %s699 = smul.addr %s698, 2
        %s700 = scalar_lea.vmem %s13, %s699
        %p701 = pneg %p365
        %p702 = pneg %p362
        %p703 = scmp.lt.s32.totalorder %s39, 1
        %s704 = scalar_select %p703, %s39, 1
        %s705 = smul.addr %s704, 32
        %s706 = smul.addr %s705, 8
        %s707 = scalar_lea.vmem %s14, %s706
        %p708 = pneg %p391
        %p709 = pneg %p388
        %p710 = scmp.lt.s32.totalorder %s39, 1
        %s711 = scalar_select %p710, %s39, 1
        %s712 = scalar_lea.vmem %s15, %s711
        %p713 = pneg %p417
        %p714 = pneg %p414
        %p715 = pneg %p438
        %p716 = pneg %p435
        %p717 = pneg %p459
        %p718 = pneg %p456
        %p719 = pneg %p480
        %p720 = pneg %p477
        %p721 = pneg %p501
        %p722 = pneg %p498
        %p723 = pneg %p527
        %p724 = pneg %p524
        %s725 = sand.u32 %s514, 1
        %s726 = scalar_lea.sflag [#allocation5], %s725
        %s727 = sand.u32 %s514, 1
        %s728 = scalar_lea.vmem [#allocation4], %s727
        %p729 = scmp.lt.s32.totalorder %s38, 1
        %s730 = scalar_select %p729, %s38, 1
        %s731 = smul.addr %s730, 4
        %s732 = smul.addr %s731, 8
        %s733 = scalar_lea.vmem %s0, %s732
        %p734 = scmp.lt.s32.totalorder %s39, 1
        %s735 = scalar_select %p734, %s39, 1
        %s736 = smul.addr %s735, 48
        %s737 = smul.addr %s736, 8
        %s738 = scalar_lea.vmem %s9, %s737
        %p739 = scmp.lt.s32.totalorder %s39, 1
        %s740 = scalar_select %p739, %s39, 1
        %s741 = smul.addr %s740, 16
        %s742 = smul.addr %s741, 8
        %s743 = scalar_lea.vmem %s10, %s742
        %p744 = scmp.lt.s32.totalorder %s39, 1
        %s745 = scalar_select %p744, %s39, 1
        %s746 = scalar_lea.vmem %s11, %s745
        %p747 = scmp.lt.s32.totalorder %s39, 1
        %s748 = scalar_select %p747, %s39, 1
        %s749 = smul.addr %s748, 32
        %s750 = smul.addr %s749, 8
        %s751 = scalar_lea.vmem %s12, %s750
        %p752 = scmp.lt.s32.totalorder %s39, 1
        %s753 = scalar_select %p752, %s39, 1
        %s754 = smul.addr %s753, 2
        %s755 = scalar_lea.vmem %s13, %s754
        %p756 = scmp.lt.s32.totalorder %s39, 1
        %s757 = scalar_select %p756, %s39, 1
        %s758 = smul.addr %s757, 32
        %s759 = smul.addr %s758, 8
        %s760 = scalar_lea.vmem %s14, %s759
        %p761 = scmp.lt.s32.totalorder %s39, 1
        %s762 = scalar_select %p761, %s39, 1
        %s763 = scalar_lea.vmem %s15, %s762
        %p764 = scmp.eq.s32.totalorder %s39, 0
        // Predicated region
        $region101: #{vit_forward.1} parent=99 // pred_check
          %p765 = pneg %p764
        $region102: #{vit_forward.1} parent=99 // pred_check_branch
          %767 = sbr.rel (%p765) target = $region104
        $region103: #{vit_forward.1} parent=99 // pred_region
          %v768 = vld [vmem:[%s733] sm:$0xff]
          %v769 = vld [vmem:[%s733 + $0x8] sm:$0xff]
          %v770 = vld [vmem:[%s733 + $0x10] sm:$0xff]
          %v771 = vld [vmem:[%s733 + $0x18] sm:$0xff]
          %v772 = vld [vmem:[%s1] sm:$0x3]
          %v773 = vld [vmem:[%s2] sm:$0x3]
          %vm774 = vcmask 916480
          %v775 = vsel %vm774, %v769, 0.0
          %v776 = vadd.f32 %v768, %v775
          %777 = vadd.xlane.f32.xlu0 %v776
          %v778 = vpop.xlane.xlu0 %777
          %v779 = vsel %vm774, %v771, 0.0
          %v780 = vadd.f32 %v770, %v779
          %781 = vadd.xlane.f32.xlu0 %v780
          %v782 = vpop.xlane.xlu0 %781
          %v783 = vrcp.pop 240.0
          %v784 = vmul.f32 240.0, %v783
          %v785 = vsub.f32 1.0, %v784
          %v786 = vmul.f32 %v783, %v785
          %v787 = vadd.f32 %v783, %v786
          %vm788 = vweird.f32 %v783
          %v789 = vsel %vm788, %v783, %v787
          %v790 = vmul.f32 %v778, %v789
          %v791 = vmul.f32 %v782, %v789
          %v792 = vsub.f32 %v768, %v790
          %v793 = vsub.f32 %v769, %v790
          %v794 = vsub.f32 %v770, %v791
          %v795 = vsub.f32 %v771, %v791
          %v796 = vmul.f32 %v792, %v792
          %v797 = vmul.f32 %v793, %v793
          %v798 = vmul.f32 %v794, %v794
          %v799 = vmul.f32 %v795, %v795
          %v800 = vsel %vm774, %v797, 0.0
          %v801 = vadd.f32 %v796, %v800
          %802 = vadd.xlane.f32.xlu0 %v801
          %v803 = vpop.xlane.xlu0 %802
          %v804 = vsel %vm774, %v799, 0.0
          %v805 = vadd.f32 %v798, %v804
          %806 = vadd.xlane.f32.xlu0 %v805
          %v807 = vpop.xlane.xlu0 %806
          %v808 = vmul.f32 %v803, %v789
          %v809 = vmul.f32 %v807, %v789
          %v810 = vadd.f32 %v808, 1e-05
          %v811 = vadd.f32 %v809, 1e-05
          %v812 = vrsqrt.pop %v810
          %v813 = vmul.f32 %v812, %v810
          %v814 = vmul.f32 %v813, %v812
          %v815 = vmul.f32 0.5, %v814
          %v816 = vsub.f32 1.5, %v815
          %v817 = vmul.f32 %v812, %v816
          %vm818 = vweird.f32 %v810
          %vm819 = vweird.f32 %v812
          %vm820 = vmor %vm818, %vm819
          %v821 = vsel %vm820, %v812, %v817
          %v822 = vrsqrt.pop %v811
          %v823 = vmul.f32 %v822, %v811
          %v824 = vmul.f32 %v823, %v822
          %v825 = vmul.f32 0.5, %v824
          %v826 = vsub.f32 1.5, %v825
          %v827 = vmul.f32 %v822, %v826
          %vm828 = vweird.f32 %v811
          %vm829 = vweird.f32 %v822
          %vm830 = vmor %vm828, %vm829
          %v831 = vsel %vm830, %v822, %v827
          %v832 = vmul.f32 %v792, %v821
          %v833 = vmul.f32 %v793, %v821
          %v834 = vmul.f32 %v794, %v831
          %v835 = vmul.f32 %v795, %v831
          %v837 = vperm.slane %v772, 0
          %v838 = vperm.slane %v772, 1
          %v841 = vmul.f32 %v832, %v837
          %v842 = vmul.f32 %v833, %v838
          %v843 = vmul.f32 %v834, %v837
          %v844 = vmul.f32 %v835, %v838
          %v846 = vperm.slane %v773, 0
          %v847 = vperm.slane %v773, 1
          %v850 = vadd.f32 %v841, %v846
          %v851 = vadd.f32 %v842, %v847
          %v852 = vadd.f32 %v843, %v846
          %v853 = vadd.f32 %v844, %v847
          %v854 = vld [vmem:[%s3] sm:$0xff]
          %v855 = vld [vmem:[%s3 + $0x8] sm:$0xff]
          %v856 = vld [vmem:[%s3 + $0x10] sm:$0xff]
          %v857 = vld [vmem:[%s3 + $0x18] sm:$0xff]
          %v858 = vld [vmem:[%s3 + $0x20] sm:$0xff]
          %v859 = vld [vmem:[%s3 + $0x28] sm:$0xff]
          %v860 = vld [vmem:[%s3 + $0x30] sm:$0xff]
          %v861 = vld [vmem:[%s3 + $0x38] sm:$0xff]
          %v862 = vld [vmem:[%s3 + $0x40] sm:$0xff]
          %v863 = vld [vmem:[%s3 + $0x48] sm:$0xff]
          %v864 = vld [vmem:[%s3 + $0x50] sm:$0xff]
          %v865 = vld [vmem:[%s3 + $0x58] sm:$0xff]
          %v866 = vld [vmem:[%s3 + $0x60] sm:$0xff]
          %v867 = vld [vmem:[%s3 + $0x68] sm:$0xff]
          %v868 = vld [vmem:[%s3 + $0x70] sm:$0xff]
          %v869 = vld [vmem:[%s3 + $0x78] sm:$0xff]
          %v870 = vld [vmem:[%s3 + $0x80] sm:$0xff]
          %v871 = vld [vmem:[%s3 + $0x88] sm:$0xff]
          %v872 = vld [vmem:[%s3 + $0x90] sm:$0xff]
          %v873 = vld [vmem:[%s3 + $0x98] sm:$0xff]
          %v874 = vld [vmem:[%s3 + $0xa0] sm:$0xff]
          %v875 = vld [vmem:[%s3 + $0xa8] sm:$0xff]
          %v876 = vld [vmem:[%s3 + $0xb0] sm:$0xff]
          %v877 = vld [vmem:[%s3 + $0xb8] sm:$0xff]
          %v878 = vld [vmem:[%s3 + $0xc0] sm:$0xff]
          %v879 = vld [vmem:[%s3 + $0xc8] sm:$0xff]
          %v880 = vld [vmem:[%s3 + $0xd0] sm:$0xff]
          %v881 = vld [vmem:[%s3 + $0xd8] sm:$0xff]
          %v882 = vld [vmem:[%s3 + $0xe0] sm:$0xff]
          %v883 = vld [vmem:[%s3 + $0xe8] sm:$0xff]
          %v884 = vld [vmem:[%s4] sm:$0x1]
          %v886 = vperm.slane %v884, 0
          %v889 = vsel %vm774, %v851, 0
          %v892 = vsel %vm774, %v853, 0
          %894 = vmatpush.msra.mxu0 %v869
          %895 = vmatpush.msra.mxu0 %v868
          %896 = vmatpush.msra.mxu0 %v867
          %897 = vmatpush.msra.mxu0 %v866
          %898 = vmatpush.msra.mxu0 %v865
          %899 = vmatpush.msra.mxu0 %v864
          %900 = vmatpush.msra.mxu0 %v863
          %901 = vmatpush.msra.mxu0 %v862
          %902 = vmatpush.msra.mxu0 %v861
          %903 = vmatpush.msra.mxu0 %v860
          %904 = vmatpush.msra.mxu0 %v859
          %905 = vmatpush.msra.mxu0 %v858
          %906 = vmatpush.msra.mxu0 %v857
          %907 = vmatpush.msra.mxu0 %v856
          %908 = vmatpush.msra.mxu0 %v855
          %909 = vmatpush.msra.mxu0 %v854
          %910 = vmatmul.f32.gmra.mxu0 %v850
          %v911 = vpop.f32.mrf.mxu0
          %v912 = vadd.f32 %v886, %v911
          %913 = vmatmul.f32.gmra.mxu0 %v852
          %v914 = vpop.f32.mrf.mxu0
          %v915 = vadd.f32 %v886, %v914
          %916 = vdwg.mxu0
          %917 = vmatpush.msra.mxu0 0.0
          %918 = vmatpush.msra.mxu0 0.0
          %919 = vmatpush.msra.mxu0 %v883
          %920 = vmatpush.msra.mxu0 %v882
          %921 = vmatpush.msra.mxu0 %v881
          %922 = vmatpush.msra.mxu0 %v880
          %923 = vmatpush.msra.mxu0 %v879
          %924 = vmatpush.msra.mxu0 %v878
          %925 = vmatpush.msra.mxu0 %v877
          %926 = vmatpush.msra.mxu0 %v876
          %927 = vmatpush.msra.mxu0 %v875
          %928 = vmatpush.msra.mxu0 %v874
          %929 = vmatpush.msra.mxu0 %v873
          %930 = vmatpush.msra.mxu0 %v872
          %931 = vmatpush.msra.mxu0 %v871
          %932 = vmatpush.msra.mxu0 %v870
          %933 = vmatmul.f32.gmra.mxu0 %v889
          %v934 = vpop.f32.mrf.mxu0
          %v935 = vadd.f32 %v912, %v934
          %936 = vmatmul.f32.gmra.mxu0 %v892
          %v937 = vpop.f32.mrf.mxu0
          %v938 = vadd.f32 %v915, %v937
          %939 = vdwg.mxu0
          %940 = vst [vmem:[#allocation2] sm:$0xff] 0.0
          %941 = vst [vmem:[#allocation2 + $0x8] sm:$0xff] 0.0
          %942 = vst [vmem:[#allocation2 + $0x10] sm:$0xff] 0.0
          %v943 = vld [vmem:[%s5] sm:$0x1]
          %v944 = vld [vmem:[%s6] sm:$0x1]
          %v945 = vadd.f32 %v943, %v944
          %946 = vst [vmem:[#allocation2] sm:$0x1] %v945
          %v947 = vld [vmem:[%s6 + $0x1] sm:$0xff]
          %v948 = vld [vmem:[%s6 + $0x9] sm:$0xff]
          %v949 = vadd.f32 %v935, %v947
          %v950 = vadd.f32 %v938, %v948
          %951 = vst [vmem:[#allocation2 + $0x1] sm:$0xff] %v949
          %952 = vst [vmem:[#allocation2 + $0x9] sm:$0xff] %v950
        $region104: #{vit_forward.1} parent=99 // pred_fallthru
          _
        %v953 = vld [vmem:[#allocation2] sm:$0xff]
        %v954 = vld [vmem:[#allocation2 + $0x8] sm:$0xff]
        %v955 = vld [vmem:[#allocation2 + $0x10] sm:$0xff]
        %v956 = vld [vmem:[%s7] sm:$0x1]
        %v957 = vld [vmem:[%s8] sm:$0x1]
        %958 = vadd.xlane.f32.xlu0 %v953
        %v959 = vpop.xlane.xlu0 %958
        %960 = vadd.xlane.f32.xlu0 %v954
        %v961 = vpop.xlane.xlu0 %960
        %962 = vadd.xlane.f32.xlu0 %v955
        %v963 = vpop.xlane.xlu0 %962
        %v964 = vrcp.pop 128.0
        %v965 = vmul.f32 128.0, %v964
        %v966 = vsub.f32 1.0, %v965
        %v967 = vmul.f32 %v964, %v966
        %v968 = vadd.f32 %v964, %v967
        %vm969 = vweird.f32 %v964
        %v970 = vsel %vm969, %v964, %v968
        %v971 = vmul.f32 %v959, %v970
        %v972 = vmul.f32 %v961, %v970
        %v973 = vmul.f32 %v963, %v970
        %v974 = vsub.f32 %v953, %v971
        %v975 = vsub.f32 %v954, %v972
        %v976 = vsub.f32 %v955, %v973
        %v977 = vmul.f32 %v974, %v974
        %v978 = vmul.f32 %v975, %v975
        %v979 = vmul.f32 %v976, %v976
        %980 = vadd.xlane.f32.xlu0 %v977
        %v981 = vpop.xlane.xlu0 %980
        %982 = vadd.xlane.f32.xlu0 %v978
        %v983 = vpop.xlane.xlu0 %982
        %984 = vadd.xlane.f32.xlu0 %v979
        %v985 = vpop.xlane.xlu0 %984
        %v986 = vmul.f32 %v981, %v970
        %v987 = vmul.f32 %v983, %v970
        %v988 = vmul.f32 %v985, %v970
        %v989 = vadd.f32 %v986, 1e-05
        %v990 = vadd.f32 %v987, 1e-05
        %v991 = vadd.f32 %v988, 1e-05
        %v992 = vrsqrt.pop %v989
        %v993 = vmul.f32 %v992, %v989
        %v994 = vmul.f32 %v993, %v992
        %v995 = vmul.f32 0.5, %v994
        %v996 = vsub.f32 1.5, %v995
        %v997 = vmul.f32 %v992, %v996
        %vm998 = vweird.f32 %v989
        %vm999 = vweird.f32 %v992
        %vm1000 = vmor %vm998, %vm999
        %v1001 = vsel %vm1000, %v992, %v997
        %v1002 = vrsqrt.pop %v990
        %v1003 = vmul.f32 %v1002, %v990
        %v1004 = vmul.f32 %v1003, %v1002
        %v1005 = vmul.f32 0.5, %v1004
        %v1006 = vsub.f32 1.5, %v1005
        %v1007 = vmul.f32 %v1002, %v1006
        %vm1008 = vweird.f32 %v990
        %vm1009 = vweird.f32 %v1002
        %vm1010 = vmor %vm1008, %vm1009
        %v1011 = vsel %vm1010, %v1002, %v1007
        %v1012 = vrsqrt.pop %v991
        %v1013 = vmul.f32 %v1012, %v991
        %v1014 = vmul.f32 %v1013, %v1012
        %v1015 = vmul.f32 0.5, %v1014
        %v1016 = vsub.f32 1.5, %v1015
        %v1017 = vmul.f32 %v1012, %v1016
        %vm1018 = vweird.f32 %v991
        %vm1019 = vweird.f32 %v1012
        %vm1020 = vmor %vm1018, %vm1019
        %v1021 = vsel %vm1020, %v1012, %v1017
        %v1022 = vmul.f32 %v974, %v1001
        %v1023 = vmul.f32 %v975, %v1011
        %v1024 = vmul.f32 %v976, %v1021
        %v1026 = vperm.slane %v956, 0
        %v1028 = vmul.f32 %v1022, %v1026
        %v1029 = vmul.f32 %v1023, %v1026
        %v1030 = vmul.f32 %v1024, %v1026
        %v1032 = vperm.slane %v957, 0
        %v1034 = vadd.f32 %v1028, %v1032
        %v1035 = vadd.f32 %v1029, %v1032
        %v1036 = vadd.f32 %v1030, %v1032
        %v1037 = vld [vmem:[%s738] sm:$0xff]
        %v1038 = vld [vmem:[%s738 + $0x8] sm:$0xff]
        %v1039 = vld [vmem:[%s738 + $0x10] sm:$0xff]
        %v1040 = vld [vmem:[%s738 + $0x18] sm:$0xff]
        %v1041 = vld [vmem:[%s738 + $0x20] sm:$0xff]
        %v1042 = vld [vmem:[%s738 + $0x28] sm:$0xff]
        %v1043 = vld [vmem:[%s738 + $0x30] sm:$0xff]
        %v1044 = vld [vmem:[%s738 + $0x38] sm:$0xff]
        %v1045 = vld [vmem:[%s738 + $0x40] sm:$0xff]
        %v1046 = vld [vmem:[%s738 + $0x48] sm:$0xff]
        %v1047 = vld [vmem:[%s738 + $0x50] sm:$0xff]
        %v1048 = vld [vmem:[%s738 + $0x58] sm:$0xff]
        %v1049 = vld [vmem:[%s738 + $0x60] sm:$0xff]
        %v1050 = vld [vmem:[%s738 + $0x68] sm:$0xff]
        %v1051 = vld [vmem:[%s738 + $0x70] sm:$0xff]
        %v1052 = vld [vmem:[%s738 + $0x78] sm:$0xff]
        %v1053 = vld [vmem:[%s738 + $0x80] sm:$0xff]
        %v1054 = vld [vmem:[%s738 + $0x88] sm:$0xff]
        %v1055 = vld [vmem:[%s738 + $0x90] sm:$0xff]
        %v1056 = vld [vmem:[%s738 + $0x98] sm:$0xff]
        %v1057 = vld [vmem:[%s738 + $0xa0] sm:$0xff]
        %v1058 = vld [vmem:[%s738 + $0xa8] sm:$0xff]
        %v1059 = vld [vmem:[%s738 + $0xb0] sm:$0xff]
        %v1060 = vld [vmem:[%s738 + $0xb8] sm:$0xff]
        %v1061 = vld [vmem:[%s738 + $0xc0] sm:$0xff]
        %v1062 = vld [vmem:[%s738 + $0xc8] sm:$0xff]
        %v1063 = vld [vmem:[%s738 + $0xd0] sm:$0xff]
        %v1064 = vld [vmem:[%s738 + $0xd8] sm:$0xff]
        %v1065 = vld [vmem:[%s738 + $0xe0] sm:$0xff]
        %v1066 = vld [vmem:[%s738 + $0xe8] sm:$0xff]
        %v1067 = vld [vmem:[%s738 + $0xf0] sm:$0xff]
        %v1068 = vld [vmem:[%s738 + $0xf8] sm:$0xff]
        %v1069 = vld [vmem:[%s738 + $0x100] sm:$0xff]
        %v1070 = vld [vmem:[%s738 + $0x108] sm:$0xff]
        %v1071 = vld [vmem:[%s738 + $0x110] sm:$0xff]
        %v1072 = vld [vmem:[%s738 + $0x118] sm:$0xff]
        %v1073 = vld [vmem:[%s738 + $0x120] sm:$0xff]
        %v1074 = vld [vmem:[%s738 + $0x128] sm:$0xff]
        %v1075 = vld [vmem:[%s738 + $0x130] sm:$0xff]
        %v1076 = vld [vmem:[%s738 + $0x138] sm:$0xff]
        %v1077 = vld [vmem:[%s738 + $0x140] sm:$0xff]
        %v1078 = vld [vmem:[%s738 + $0x148] sm:$0xff]
        %v1079 = vld [vmem:[%s738 + $0x150] sm:$0xff]
        %v1080 = vld [vmem:[%s738 + $0x158] sm:$0xff]
        %v1081 = vld [vmem:[%s738 + $0x160] sm:$0xff]
        %v1082 = vld [vmem:[%s738 + $0x168] sm:$0xff]
        %v1083 = vld [vmem:[%s738 + $0x170] sm:$0xff]
        %v1084 = vld [vmem:[%s738 + $0x178] sm:$0xff]
        %1085 = vmatpush.msra.mxu0 %v1082
        %1086 = vmatpush.msra.mxu0 %v1079
        %1087 = vmatpush.msra.mxu0 %v1076
        %1088 = vmatpush.msra.mxu0 %v1073
        %1089 = vmatpush.msra.mxu0 %v1070
        %1090 = vmatpush.msra.mxu0 %v1067
        %1091 = vmatpush.msra.mxu0 %v1064
        %1092 = vmatpush.msra.mxu0 %v1061
        %1093 = vmatpush.msra.mxu0 %v1058
        %1094 = vmatpush.msra.mxu0 %v1055
        %1095 = vmatpush.msra.mxu0 %v1052
        %1096 = vmatpush.msra.mxu0 %v1049
        %1097 = vmatpush.msra.mxu0 %v1046
        %1098 = vmatpush.msra.mxu0 %v1043
        %1099 = vmatpush.msra.mxu0 %v1040
        %1100 = vmatpush.msra.mxu0 %v1037
        %1101 = vmatmul.f32.gmra.mxu0 %v1034
        %v1102 = vpop.f32.mrf.mxu0
        %v1103 = vadd.f32 0.0, %v1102
        %1104 = vmatmul.f32.gmra.mxu0 %v1035
        %v1105 = vpop.f32.mrf.mxu0
        %v1106 = vadd.f32 0.0, %v1105
        %1107 = vmatmul.f32.gmra.mxu0 %v1036
        %v1108 = vpop.f32.mrf.mxu0
        %v1109 = vadd.f32 0.0, %v1108
        %1110 = vdwg.mxu0
        %1111 = vmatpush.msra.mxu0 %v1083
        %1112 = vmatpush.msra.mxu0 %v1080
        %1113 = vmatpush.msra.mxu0 %v1077
        %1114 = vmatpush.msra.mxu0 %v1074
        %1115 = vmatpush.msra.mxu0 %v1071
        %1116 = vmatpush.msra.mxu0 %v1068
        %1117 = vmatpush.msra.mxu0 %v1065
        %1118 = vmatpush.msra.mxu0 %v1062
        %1119 = vmatpush.msra.mxu0 %v1059
        %1120 = vmatpush.msra.mxu0 %v1056
        %1121 = vmatpush.msra.mxu0 %v1053
        %1122 = vmatpush.msra.mxu0 %v1050
        %1123 = vmatpush.msra.mxu0 %v1047
        %1124 = vmatpush.msra.mxu0 %v1044
        %1125 = vmatpush.msra.mxu0 %v1041
        %1126 = vmatpush.msra.mxu0 %v1038
        %1127 = vmatmul.f32.gmra.mxu0 %v1034
        %v1128 = vpop.f32.mrf.mxu0
        %v1129 = vadd.f32 0.0, %v1128
        %1130 = vmatmul.f32.gmra.mxu0 %v1035
        %v1131 = vpop.f32.mrf.mxu0
        %v1132 = vadd.f32 0.0, %v1131
        %1133 = vmatmul.f32.gmra.mxu0 %v1036
        %v1134 = vpop.f32.mrf.mxu0
        %v1135 = vadd.f32 0.0, %v1134
        %1136 = vdwg.mxu0
        %1137 = vmatpush.msra.mxu0 %v1084
        %1138 = vmatpush.msra.mxu0 %v1081
        %1139 = vmatpush.msra.mxu0 %v1078
        %1140 = vmatpush.msra.mxu0 %v1075
        %1141 = vmatpush.msra.mxu0 %v1072
        %1142 = vmatpush.msra.mxu0 %v1069
        %1143 = vmatpush.msra.mxu0 %v1066
        %1144 = vmatpush.msra.mxu0 %v1063
        %1145 = vmatpush.msra.mxu0 %v1060
        %1146 = vmatpush.msra.mxu0 %v1057
        %1147 = vmatpush.msra.mxu0 %v1054
        %1148 = vmatpush.msra.mxu0 %v1051
        %1149 = vmatpush.msra.mxu0 %v1048
        %1150 = vmatpush.msra.mxu0 %v1045
        %1151 = vmatpush.msra.mxu0 %v1042
        %1152 = vmatpush.msra.mxu0 %v1039
        %1153 = vmatmul.f32.gmra.mxu0 %v1034
        %v1154 = vpop.f32.mrf.mxu0
        %v1155 = vadd.f32 0.0, %v1154
        %1156 = vmatmul.f32.gmra.mxu0 %v1035
        %v1157 = vpop.f32.mrf.mxu0
        %v1158 = vadd.f32 0.0, %v1157
        %1159 = vmatmul.f32.gmra.mxu0 %v1036
        %v1160 = vpop.f32.mrf.mxu0
        %v1161 = vadd.f32 0.0, %v1160
        %1162 = vdwg.mxu0
        %v1163 = vlaneseq
        %v1164 = vshrl.u32 %v1163, 7
        %v1165 = vadd.s32 %v1164, 8
        %v1166 = vadd.s32 %v1164, 16
        %v1167 = vlaneseq
        %v1168 = vand.u32 %v1167, 127
        %vm1169 = vcmp.eq.s32.totalorder %v1164, %v1168
        %vm1170 = vcmp.eq.s32.totalorder %v1165, %v1168
        %vm1171 = vcmp.eq.s32.totalorder %v1166, %v1168
        %vm1172 = vcmp.ge.s32.totalorder %v1168, 17
        %vm1173 = vmor %vm1169, %vm1172
        %vm1174 = vmor %vm1170, %vm1172
        %vm1175 = vmor %vm1171, %vm1172
        %vm1176 = vcmask 261120
        %v1178 = vsel %vm1176, %v1103, 0
        %v1181 = vsel %vm1176, %v1106, 0
        %v1184 = vsel %vm1176, %v1109, 0
        %v1187 = vsel %vm1176, %v1129, 0
        %v1190 = vsel %vm1176, %v1132, 0
        %v1193 = vsel %vm1176, %v1135, 0
        %1195 = vmatpush.xpose.msra.mxu0 0.0
        %1196 = vmatpush.xpose.msra.mxu0 0.0
        %1197 = vmatpush.xpose.msra.mxu0 0.0
        %1198 = vmatpush.xpose.msra.mxu0 0.0
        %1199 = vmatpush.xpose.msra.mxu0 0.0
        %1200 = vmatpush.xpose.msra.mxu0 0.0
        %1201 = vmatpush.xpose.msra.mxu0 0.0
        %1202 = vmatpush.xpose.msra.mxu0 0.0
        %1203 = vmatpush.xpose.msra.mxu0 0.0
        %1204 = vmatpush.xpose.msra.mxu0 0.0
        %1205 = vmatpush.xpose.msra.mxu0 0.0
        %1206 = vmatpush.xpose.msra.mxu0 0.0
        %1207 = vmatpush.xpose.msra.mxu0 0.0
        %1208 = vmatpush.xpose.msra.mxu0 %v1193
        %1209 = vmatpush.xpose.msra.mxu0 %v1190
        %1210 = vmatpush.xpose.msra.mxu0 %v1187
        %1211 = vmatmul.f32.gmra.mxu0 %v1178
        %v1212 = vpop.f32.mrf.mxu0
        %v1213 = vadd.f32 0.0, %v1212
        %1214 = vmatmul.f32.gmra.mxu0 %v1181
        %v1215 = vpop.f32.mrf.mxu0
        %v1216 = vadd.f32 0.0, %v1215
        %1217 = vmatmul.f32.gmra.mxu0 %v1184
        %v1218 = vpop.f32.mrf.mxu0
        %v1219 = vadd.f32 0.0, %v1218
        %1220 = vdwg.mxu0
        %v1221 = vsel %vm1173, -3.4028235e+38, %v1213
        %v1222 = vsel %vm1174, -3.4028235e+38, %v1216
        %v1223 = vsel %vm1175, -3.4028235e+38, %v1219
        %vm1224 = vcmask 195584
        %v1225 = vsel %vm1224, %v1221, -inf
        %1226 = vmax.xlane.f32.xlu0 %v1225
        %v1227 = vpop.xlane.xlu0 %1226
        %v1228 = vsel %vm1224, %v1222, -inf
        %1229 = vmax.xlane.f32.xlu0 %v1228
        %v1230 = vpop.xlane.xlu0 %1229
        %v1231 = vsel %vm1224, %v1223, -inf
        %1232 = vmax.xlane.f32.xlu0 %v1231
        %v1233 = vpop.xlane.xlu0 %1232
        %v1234 = vsub.f32 %v1221, %v1227
        %v1235 = vsub.f32 %v1222, %v1230
        %v1236 = vsub.f32 %v1223, %v1233
        %v1237 = vmul.f32 %v1234, 1.442695
        %v1238 = vpow.pop %v1237
        %v1239 = vmul.f32 %v1235, 1.442695
        %v1240 = vpow.pop %v1239
        %v1241 = vmul.f32 %v1236, 1.442695
        %v1242 = vpow.pop %v1241
        %v1243 = vsel %vm1224, %v1238, 0.0
        %1244 = vadd.xlane.f32.xlu0 %v1243
        %v1245 = vpop.xlane.xlu0 %1244
        %v1246 = vsel %vm1224, %v1240, 0.0
        %1247 = vadd.xlane.f32.xlu0 %v1246
        %v1248 = vpop.xlane.xlu0 %1247
        %v1249 = vsel %vm1224, %v1242, 0.0
        %1250 = vadd.xlane.f32.xlu0 %v1249
        %v1251 = vpop.xlane.xlu0 %1250
        %v1252 = vrcp.pop %v1245
        %v1253 = vrcp.pop %v1248
        %v1254 = vrcp.pop %v1251
        %v1255 = vmul.f32 %v1238, %v1252
        %v1256 = vmul.f32 %v1240, %v1253
        %v1257 = vmul.f32 %v1242, %v1254
        %v1259 = vsel %vm1224, %v1255, 0
        %v1262 = vsel %vm1224, %v1256, 0
        %v1265 = vsel %vm1224, %v1257, 0
        %1267 = vmatpush.msra.mxu0 0.0
        %1268 = vmatpush.msra.mxu0 0.0
        %1269 = vmatpush.msra.mxu0 0.0
        %1270 = vmatpush.msra.mxu0 0.0
        %1271 = vmatpush.msra.mxu0 0.0
        %1272 = vmatpush.msra.mxu0 0.0
        %1273 = vmatpush.msra.mxu0 0.0
        %1274 = vmatpush.msra.mxu0 0.0
        %1275 = vmatpush.msra.mxu0 0.0
        %1276 = vmatpush.msra.mxu0 0.0
        %1277 = vmatpush.msra.mxu0 0.0
        %1278 = vmatpush.msra.mxu0 0.0
        %1279 = vmatpush.msra.mxu0 0.0
        %1280 = vmatpush.msra.mxu0 %v1161
        %1281 = vmatpush.msra.mxu0 %v1158
        %1282 = vmatpush.msra.mxu0 %v1155
        %1283 = vmatmul.f32.gmra.mxu0 %v1259
        %v1284 = vpop.f32.mrf.mxu0
        %v1285 = vadd.f32 0.0, %v1284
        %1286 = vmatmul.f32.gmra.mxu0 %v1262
        %v1287 = vpop.f32.mrf.mxu0
        %v1288 = vadd.f32 0.0, %v1287
        %1289 = vmatmul.f32.gmra.mxu0 %v1265
        %v1290 = vpop.f32.mrf.mxu0
        %v1291 = vadd.f32 0.0, %v1290
        %1292 = vdwg.mxu0
        %1293 = vst.msk [vmem:[#allocation3] sm:$0xff] %vm1176, %v1285
        %1294 = vst.msk [vmem:[#allocation3 + $0x8] sm:$0xff] %vm1176, %v1288
        %1295 = vst.msk [vmem:[#allocation3 + $0x10] sm:$0xff] %vm1176, %v1291
        %1296 = vrot.lane.b32.xlu0 %v1103, 96
        %v1297 = vpop.permute.xlu0 %1296
        %1298 = vrot.lane.b32.xlu0 %v1106, 96
        %v1299 = vpop.permute.xlu0 %1298
        %1300 = vrot.lane.b32.xlu0 %v1109, 96
        %v1301 = vpop.permute.xlu0 %1300
        %1302 = vrot.lane.b32.xlu0 %v1129, 96
        %v1303 = vpop.permute.xlu0 %1302
        %1304 = vrot.lane.b32.xlu0 %v1132, 96
        %v1305 = vpop.permute.xlu0 %1304
        %1306 = vrot.lane.b32.xlu0 %v1135, 96
        %v1307 = vpop.permute.xlu0 %1306
        %v1308 = vsel %vm1176, %v1297, 0
        %v1310 = vsel %vm1176, %v1299, 0
        %v1312 = vsel %vm1176, %v1301, 0
        %v1314 = vsel %vm1176, %v1303, 0
        %v1316 = vsel %vm1176, %v1305, 0
        %v1318 = vsel %vm1176, %v1307, 0
        %1320 = vmatpush.xpose.msra.mxu0 0.0
        %1321 = vmatpush.xpose.msra.mxu0 0.0
        %1322 = vmatpush.xpose.msra.mxu0 0.0
        %1323 = vmatpush.xpose.msra.mxu0 0.0
        %1324 = vmatpush.xpose.msra.mxu0 0.0
        %1325 = vmatpush.xpose.msra.mxu0 0.0
        %1326 = vmatpush.xpose.msra.mxu0 0.0
        %1327 = vmatpush.xpose.msra.mxu0 0.0
        %1328 = vmatpush.xpose.msra.mxu0 0.0
        %1329 = vmatpush.xpose.msra.mxu0 0.0
        %1330 = vmatpush.xpose.msra.mxu0 0.0
        %1331 = vmatpush.xpose.msra.mxu0 0.0
        %1332 = vmatpush.xpose.msra.mxu0 0.0
        %1333 = vmatpush.xpose.msra.mxu0 %v1318
        %1334 = vmatpush.xpose.msra.mxu0 %v1316
        %1335 = vmatpush.xpose.msra.mxu0 %v1314
        %1336 = vmatmul.f32.gmra.mxu0 %v1308
        %v1337 = vpop.f32.mrf.mxu0
        %v1338 = vadd.f32 0.0, %v1337
        %1339 = vmatmul.f32.gmra.mxu0 %v1310
        %v1340 = vpop.f32.mrf.mxu0
        %v1341 = vadd.f32 0.0, %v1340
        %1342 = vmatmul.f32.gmra.mxu0 %v1312
        %v1343 = vpop.f32.mrf.mxu0
        %v1344 = vadd.f32 0.0, %v1343
        %1345 = vdwg.mxu0
        %v1346 = vsel %vm1173, -3.4028235e+38, %v1338
        %v1347 = vsel %vm1174, -3.4028235e+38, %v1341
        %v1348 = vsel %vm1175, -3.4028235e+38, %v1344
        %v1349 = vsel %vm1224, %v1346, -inf
        %1350 = vmax.xlane.f32.xlu0 %v1349
        %v1351 = vpop.xlane.xlu0 %1350
        %v1352 = vsel %vm1224, %v1347, -inf
        %1353 = vmax.xlane.f32.xlu0 %v1352
        %v1354 = vpop.xlane.xlu0 %1353
        %v1355 = vsel %vm1224, %v1348, -inf
        %1356 = vmax.xlane.f32.xlu0 %v1355
        %v1357 = vpop.xlane.xlu0 %1356
        %v1358 = vsub.f32 %v1346, %v1351
        %v1359 = vsub.f32 %v1347, %v1354
        %v1360 = vsub.f32 %v1348, %v1357
        %v1361 = vmul.f32 %v1358, 1.442695
        %v1362 = vpow.pop %v1361
        %v1363 = vmul.f32 %v1359, 1.442695
        %v1364 = vpow.pop %v1363
        %v1365 = vmul.f32 %v1360, 1.442695
        %v1366 = vpow.pop %v1365
        %v1367 = vsel %vm1224, %v1362, 0.0
        %1368 = vadd.xlane.f32.xlu0 %v1367
        %v1369 = vpop.xlane.xlu0 %1368
        %v1370 = vsel %vm1224, %v1364, 0.0
        %1371 = vadd.xlane.f32.xlu0 %v1370
        %v1372 = vpop.xlane.xlu0 %1371
        %v1373 = vsel %vm1224, %v1366, 0.0
        %1374 = vadd.xlane.f32.xlu0 %v1373
        %v1375 = vpop.xlane.xlu0 %1374
        %v1376 = vrcp.pop %v1369
        %v1377 = vrcp.pop %v1372
        %v1378 = vrcp.pop %v1375
        %v1379 = vmul.f32 %v1362, %v1376
        %v1380 = vmul.f32 %v1364, %v1377
        %v1381 = vmul.f32 %v1366, %v1378
        %1385 = vrot.lane.b32.xlu0 %v1155, 96
        %v1386 = vpop.permute.xlu0 %1385
        %1387 = vrot.lane.b32.xlu0 %v1158, 96
        %v1388 = vpop.permute.xlu0 %1387
        %1389 = vrot.lane.b32.xlu0 %v1161, 96
        %v1390 = vpop.permute.xlu0 %1389
        %v1395 = vsel %vm1224, %v1379, 0
        %v1398 = vsel %vm1224, %v1380, 0
        %v1401 = vsel %vm1224, %v1381, 0
        %1403 = vmatpush.msra.mxu0 0.0
        %1404 = vmatpush.msra.mxu0 0.0
        %1405 = vmatpush.msra.mxu0 0.0
        %1406 = vmatpush.msra.mxu0 0.0
        %1407 = vmatpush.msra.mxu0 0.0
        %1408 = vmatpush.msra.mxu0 0.0
        %1409 = vmatpush.msra.mxu0 0.0
        %1410 = vmatpush.msra.mxu0 0.0
        %1411 = vmatpush.msra.mxu0 0.0
        %1412 = vmatpush.msra.mxu0 0.0
        %1413 = vmatpush.msra.mxu0 0.0
        %1414 = vmatpush.msra.mxu0 0.0
        %1415 = vmatpush.msra.mxu0 0.0
        %1416 = vmatpush.msra.mxu0 %v1390
        %1417 = vmatpush.msra.mxu0 %v1388
        %1418 = vmatpush.msra.mxu0 %v1386
        %1419 = vmatmul.f32.gmra.mxu0 %v1395
        %v1420 = vpop.f32.mrf.mxu0
        %v1421 = vadd.f32 0.0, %v1420
        %1422 = vmatmul.f32.gmra.mxu0 %v1398
        %v1423 = vpop.f32.mrf.mxu0
        %v1424 = vadd.f32 0.0, %v1423
        %1425 = vmatmul.f32.gmra.mxu0 %v1401
        %v1426 = vpop.f32.mrf.mxu0
        %v1427 = vadd.f32 0.0, %v1426
        %1428 = vdwg.mxu0
        %1432 = vrot.lane.b32.xlu0 %v1421, 32
        %v1433 = vpop.permute.xlu0 %1432
        %1434 = vrot.lane.b32.xlu0 %v1424, 32
        %v1435 = vpop.permute.xlu0 %1434
        %1436 = vrot.lane.b32.xlu0 %v1427, 32
        %v1437 = vpop.permute.xlu0 %1436
        %vm1441 = vcmask 523520
        %1442 = vst.msk [vmem:[#allocation3] sm:$0xff] %vm1441, %v1433
        %1443 = vst.msk [vmem:[#allocation3 + $0x8] sm:$0xff] %vm1441, %v1435
        %1444 = vst.msk [vmem:[#allocation3 + $0x10] sm:$0xff] %vm1441, %v1437
        %1445 = vrot.lane.b32.xlu0 %v1103, 64
        %v1446 = vpop.permute.xlu0 %1445
        %1447 = vrot.lane.b32.xlu0 %v1106, 64
        %v1448 = vpop.permute.xlu0 %1447
        %1449 = vrot.lane.b32.xlu0 %v1109, 64
        %v1450 = vpop.permute.xlu0 %1449
        %1451 = vrot.lane.b32.xlu0 %v1129, 64
        %v1452 = vpop.permute.xlu0 %1451
        %1453 = vrot.lane.b32.xlu0 %v1132, 64
        %v1454 = vpop.permute.xlu0 %1453
        %1455 = vrot.lane.b32.xlu0 %v1135, 64
        %v1456 = vpop.permute.xlu0 %1455
        %v1457 = vsel %vm1176, %v1446, 0
        %v1459 = vsel %vm1176, %v1448, 0
        %v1461 = vsel %vm1176, %v1450, 0
        %v1463 = vsel %vm1176, %v1452, 0
        %v1465 = vsel %vm1176, %v1454, 0
        %v1467 = vsel %vm1176, %v1456, 0
        %1469 = vmatpush.xpose.msra.mxu0 0.0
        %1470 = vmatpush.xpose.msra.mxu0 0.0
        %1471 = vmatpush.xpose.msra.mxu0 0.0
        %1472 = vmatpush.xpose.msra.mxu0 0.0
        %1473 = vmatpush.xpose.msra.mxu0 0.0
        %1474 = vmatpush.xpose.msra.mxu0 0.0
        %1475 = vmatpush.xpose.msra.mxu0 0.0
        %1476 = vmatpush.xpose.msra.mxu0 0.0
        %1477 = vmatpush.xpose.msra.mxu0 0.0
        %1478 = vmatpush.xpose.msra.mxu0 0.0
        %1479 = vmatpush.xpose.msra.mxu0 0.0
        %1480 = vmatpush.xpose.msra.mxu0 0.0
        %1481 = vmatpush.xpose.msra.mxu0 0.0
        %1482 = vmatpush.xpose.msra.mxu0 %v1467
        %1483 = vmatpush.xpose.msra.mxu0 %v1465
        %1484 = vmatpush.xpose.msra.mxu0 %v1463
        %1485 = vmatmul.f32.gmra.mxu0 %v1457
        %v1486 = vpop.f32.mrf.mxu0
        %v1487 = vadd.f32 0.0, %v1486
        %1488 = vmatmul.f32.gmra.mxu0 %v1459
        %v1489 = vpop.f32.mrf.mxu0
        %v1490 = vadd.f32 0.0, %v1489
        %1491 = vmatmul.f32.gmra.mxu0 %v1461
        %v1492 = vpop.f32.mrf.mxu0
        %v1493 = vadd.f32 0.0, %v1492
        %1494 = vdwg.mxu0
        %v1495 = vsel %vm1173, -3.4028235e+38, %v1487
        %v1496 = vsel %vm1174, -3.4028235e+38, %v1490
        %v1497 = vsel %vm1175, -3.4028235e+38, %v1493
        %v1498 = vsel %vm1224, %v1495, -inf
        %1499 = vmax.xlane.f32.xlu0 %v1498
        %v1500 = vpop.xlane.xlu0 %1499
        %v1501 = vsel %vm1224, %v1496, -inf
        %1502 = vmax.xlane.f32.xlu0 %v1501
        %v1503 = vpop.xlane.xlu0 %1502
        %v1504 = vsel %vm1224, %v1497, -inf
        %1505 = vmax.xlane.f32.xlu0 %v1504
        %v1506 = vpop.xlane.xlu0 %1505
        %v1507 = vsub.f32 %v1495, %v1500
        %v1508 = vsub.f32 %v1496, %v1503
        %v1509 = vsub.f32 %v1497, %v1506
        %v1510 = vmul.f32 %v1507, 1.442695
        %v1511 = vpow.pop %v1510
        %v1512 = vmul.f32 %v1508, 1.442695
        %v1513 = vpow.pop %v1512
        %v1514 = vmul.f32 %v1509, 1.442695
        %v1515 = vpow.pop %v1514
        %v1516 = vsel %vm1224, %v1511, 0.0
        %1517 = vadd.xlane.f32.xlu0 %v1516
        %v1518 = vpop.xlane.xlu0 %1517
        %v1519 = vsel %vm1224, %v1513, 0.0
        %1520 = vadd.xlane.f32.xlu0 %v1519
        %v1521 = vpop.xlane.xlu0 %1520
        %v1522 = vsel %vm1224, %v1515, 0.0
        %1523 = vadd.xlane.f32.xlu0 %v1522
        %v1524 = vpop.xlane.xlu0 %1523
        %v1525 = vrcp.pop %v1518
        %v1526 = vrcp.pop %v1521
        %v1527 = vrcp.pop %v1524
        %v1528 = vmul.f32 %v1511, %v1525
        %v1529 = vmul.f32 %v1513, %v1526
        %v1530 = vmul.f32 %v1515, %v1527
        %1531 = vrot.lane.b32.xlu0 %v1155, 64
        %v1532 = vpop.permute.xlu0 %1531
        %1533 = vrot.lane.b32.xlu0 %v1158, 64
        %v1534 = vpop.permute.xlu0 %1533
        %1535 = vrot.lane.b32.xlu0 %v1161, 64
        %v1536 = vpop.permute.xlu0 %1535
        %v1541 = vsel %vm1224, %v1528, 0
        %v1544 = vsel %vm1224, %v1529, 0
        %v1547 = vsel %vm1224, %v1530, 0
        %1549 = vmatpush.msra.mxu0 0.0
        %1550 = vmatpush.msra.mxu0 0.0
        %1551 = vmatpush.msra.mxu0 0.0
        %1552 = vmatpush.msra.mxu0 0.0
        %1553 = vmatpush.msra.mxu0 0.0
        %1554 = vmatpush.msra.mxu0 0.0
        %1555 = vmatpush.msra.mxu0 0.0
        %1556 = vmatpush.msra.mxu0 0.0
        %1557 = vmatpush.msra.mxu0 0.0
        %1558 = vmatpush.msra.mxu0 0.0
        %1559 = vmatpush.msra.mxu0 0.0
        %1560 = vmatpush.msra.mxu0 0.0
        %1561 = vmatpush.msra.mxu0 0.0
        %1562 = vmatpush.msra.mxu0 %v1536
        %1563 = vmatpush.msra.mxu0 %v1534
        %1564 = vmatpush.msra.mxu0 %v1532
        %1565 = vmatmul.f32.gmra.mxu0 %v1541
        %v1566 = vpop.f32.mrf.mxu0
        %v1567 = vadd.f32 0.0, %v1566
        %1568 = vmatmul.f32.gmra.mxu0 %v1544
        %v1569 = vpop.f32.mrf.mxu0
        %v1570 = vadd.f32 0.0, %v1569
        %1571 = vmatmul.f32.gmra.mxu0 %v1547
        %v1572 = vpop.f32.mrf.mxu0
        %v1573 = vadd.f32 0.0, %v1572
        %1574 = vdwg.mxu0
        %1578 = vrot.lane.b32.xlu0 %v1567, 64
        %v1579 = vpop.permute.xlu0 %1578
        %1580 = vrot.lane.b32.xlu0 %v1570, 64
        %v1581 = vpop.permute.xlu0 %1580
        %1582 = vrot.lane.b32.xlu0 %v1573, 64
        %v1583 = vpop.permute.xlu0 %1582
        %vm1587 = vcmask 785920
        %1588 = vst.msk [vmem:[#allocation3] sm:$0xff] %vm1587, %v1579
        %1589 = vst.msk [vmem:[#allocation3 + $0x8] sm:$0xff] %vm1587, %v1581
        %1590 = vst.msk [vmem:[#allocation3 + $0x10] sm:$0xff] %vm1587, %v1583
        %1591 = vrot.lane.b32.xlu0 %v1103, 32
        %v1592 = vpop.permute.xlu0 %1591
        %1593 = vrot.lane.b32.xlu0 %v1106, 32
        %v1594 = vpop.permute.xlu0 %1593
        %1595 = vrot.lane.b32.xlu0 %v1109, 32
        %v1596 = vpop.permute.xlu0 %1595
        %1597 = vrot.lane.b32.xlu0 %v1129, 32
        %v1598 = vpop.permute.xlu0 %1597
        %1599 = vrot.lane.b32.xlu0 %v1132, 32
        %v1600 = vpop.permute.xlu0 %1599
        %1601 = vrot.lane.b32.xlu0 %v1135, 32
        %v1602 = vpop.permute.xlu0 %1601
        %v1603 = vsel %vm1176, %v1592, 0
        %v1605 = vsel %vm1176, %v1594, 0
        %v1607 = vsel %vm1176, %v1596, 0
        %v1609 = vsel %vm1176, %v1598, 0
        %v1611 = vsel %vm1176, %v1600, 0
        %v1613 = vsel %vm1176, %v1602, 0
        %1615 = vmatpush.xpose.msra.mxu0 0.0
        %1616 = vmatpush.xpose.msra.mxu0 0.0
        %1617 = vmatpush.xpose.msra.mxu0 0.0
        %1618 = vmatpush.xpose.msra.mxu0 0.0
        %1619 = vmatpush.xpose.msra.mxu0 0.0
        %1620 = vmatpush.xpose.msra.mxu0 0.0
        %1621 = vmatpush.xpose.msra.mxu0 0.0
        %1622 = vmatpush.xpose.msra.mxu0 0.0
        %1623 = vmatpush.xpose.msra.mxu0 0.0
        %1624 = vmatpush.xpose.msra.mxu0 0.0
        %1625 = vmatpush.xpose.msra.mxu0 0.0
        %1626 = vmatpush.xpose.msra.mxu0 0.0
        %1627 = vmatpush.xpose.msra.mxu0 0.0
        %1628 = vmatpush.xpose.msra.mxu0 %v1613
        %1629 = vmatpush.xpose.msra.mxu0 %v1611
        %1630 = vmatpush.xpose.msra.mxu0 %v1609
        %1631 = vmatmul.f32.gmra.mxu0 %v1603
        %v1632 = vpop.f32.mrf.mxu0
        %v1633 = vadd.f32 0.0, %v1632
        %1634 = vmatmul.f32.gmra.mxu0 %v1605
        %v1635 = vpop.f32.mrf.mxu0
        %v1636 = vadd.f32 0.0, %v1635
        %1637 = vmatmul.f32.gmra.mxu0 %v1607
        %v1638 = vpop.f32.mrf.mxu0
        %v1639 = vadd.f32 0.0, %v1638
        %1640 = vdwg.mxu0
        %v1641 = vsel %vm1173, -3.4028235e+38, %v1633
        %v1642 = vsel %vm1174, -3.4028235e+38, %v1636
        %v1643 = vsel %vm1175, -3.4028235e+38, %v1639
        %v1644 = vsel %vm1224, %v1641, -inf
        %1645 = vmax.xlane.f32.xlu0 %v1644
        %v1646 = vpop.xlane.xlu0 %1645
        %v1647 = vsel %vm1224, %v1642, -inf
        %1648 = vmax.xlane.f32.xlu0 %v1647
        %v1649 = vpop.xlane.xlu0 %1648
        %v1650 = vsel %vm1224, %v1643, -inf
        %1651 = vmax.xlane.f32.xlu0 %v1650
        %v1652 = vpop.xlane.xlu0 %1651
        %v1653 = vsub.f32 %v1641, %v1646
        %v1654 = vsub.f32 %v1642, %v1649
        %v1655 = vsub.f32 %v1643, %v1652
        %v1656 = vmul.f32 %v1653, 1.442695
        %v1657 = vpow.pop %v1656
        %v1658 = vmul.f32 %v1654, 1.442695
        %v1659 = vpow.pop %v1658
        %v1660 = vmul.f32 %v1655, 1.442695
        %v1661 = vpow.pop %v1660
        %v1662 = vsel %vm1224, %v1657, 0.0
        %1663 = vadd.xlane.f32.xlu0 %v1662
        %v1664 = vpop.xlane.xlu0 %1663
        %v1665 = vsel %vm1224, %v1659, 0.0
        %1666 = vadd.xlane.f32.xlu0 %v1665
        %v1667 = vpop.xlane.xlu0 %1666
        %v1668 = vsel %vm1224, %v1661, 0.0
        %1669 = vadd.xlane.f32.xlu0 %v1668
        %v1670 = vpop.xlane.xlu0 %1669
        %v1671 = vrcp.pop %v1664
        %v1672 = vrcp.pop %v1667
        %v1673 = vrcp.pop %v1670
        %v1674 = vmul.f32 %v1657, %v1671
        %v1675 = vmul.f32 %v1659, %v1672
        %v1676 = vmul.f32 %v1661, %v1673
        %1677 = vrot.lane.b32.xlu0 %v1155, 32
        %v1678 = vpop.permute.xlu0 %1677
        %1679 = vrot.lane.b32.xlu0 %v1158, 32
        %v1680 = vpop.permute.xlu0 %1679
        %1681 = vrot.lane.b32.xlu0 %v1161, 32
        %v1682 = vpop.permute.xlu0 %1681
        %v1687 = vsel %vm1224, %v1674, 0
        %v1690 = vsel %vm1224, %v1675, 0
        %v1693 = vsel %vm1224, %v1676, 0
        %1695 = vmatpush.msra.mxu0 0.0
        %1696 = vmatpush.msra.mxu0 0.0
        %1697 = vmatpush.msra.mxu0 0.0
        %1698 = vmatpush.msra.mxu0 0.0
        %1699 = vmatpush.msra.mxu0 0.0
        %1700 = vmatpush.msra.mxu0 0.0
        %1701 = vmatpush.msra.mxu0 0.0
        %1702 = vmatpush.msra.mxu0 0.0
        %1703 = vmatpush.msra.mxu0 0.0
        %1704 = vmatpush.msra.mxu0 0.0
        %1705 = vmatpush.msra.mxu0 0.0
        %1706 = vmatpush.msra.mxu0 0.0
        %1707 = vmatpush.msra.mxu0 0.0
        %1708 = vmatpush.msra.mxu0 %v1682
        %1709 = vmatpush.msra.mxu0 %v1680
        %1710 = vmatpush.msra.mxu0 %v1678
        %1711 = vmatmul.f32.gmra.mxu0 %v1687
        %v1712 = vpop.f32.mrf.mxu0
        %v1713 = vadd.f32 0.0, %v1712
        %1714 = vmatmul.f32.gmra.mxu0 %v1690
        %v1715 = vpop.f32.mrf.mxu0
        %v1716 = vadd.f32 0.0, %v1715
        %1717 = vmatmul.f32.gmra.mxu0 %v1693
        %v1718 = vpop.f32.mrf.mxu0
        %v1719 = vadd.f32 0.0, %v1718
        %1720 = vdwg.mxu0
        %1724 = vrot.lane.b32.xlu0 %v1713, 96
        %v1725 = vpop.permute.xlu0 %1724
        %1726 = vrot.lane.b32.xlu0 %v1716, 96
        %v1727 = vpop.permute.xlu0 %1726
        %1728 = vrot.lane.b32.xlu0 %v1719, 96
        %v1729 = vpop.permute.xlu0 %1728
        %vm1733 = vcmask 1048320
        %1734 = vst.msk [vmem:[#allocation3] sm:$0xff] %vm1733, %v1725
        %1735 = vst.msk [vmem:[#allocation3 + $0x8] sm:$0xff] %vm1733, %v1727
        %1736 = vst.msk [vmem:[#allocation3 + $0x10] sm:$0xff] %vm1733, %v1729
        %v1737 = vld [vmem:[#allocation3] sm:$0xff]
        %v1738 = vld [vmem:[#allocation3 + $0x8] sm:$0xff]
        %v1739 = vld [vmem:[#allocation3 + $0x10] sm:$0xff]
        %v1740 = vld [vmem:[%s743] sm:$0xff]
        %v1741 = vld [vmem:[%s743 + $0x8] sm:$0xff]
        %v1742 = vld [vmem:[%s743 + $0x10] sm:$0xff]
        %v1743 = vld [vmem:[%s743 + $0x18] sm:$0xff]
        %v1744 = vld [vmem:[%s743 + $0x20] sm:$0xff]
        %v1745 = vld [vmem:[%s743 + $0x28] sm:$0xff]
        %v1746 = vld [vmem:[%s743 + $0x30] sm:$0xff]
        %v1747 = vld [vmem:[%s743 + $0x38] sm:$0xff]
        %v1748 = vld [vmem:[%s743 + $0x40] sm:$0xff]
        %v1749 = vld [vmem:[%s743 + $0x48] sm:$0xff]
        %v1750 = vld [vmem:[%s743 + $0x50] sm:$0xff]
        %v1751 = vld [vmem:[%s743 + $0x58] sm:$0xff]
        %v1752 = vld [vmem:[%s743 + $0x60] sm:$0xff]
        %v1753 = vld [vmem:[%s743 + $0x68] sm:$0xff]
        %v1754 = vld [vmem:[%s743 + $0x70] sm:$0xff]
        %v1755 = vld [vmem:[%s743 + $0x78] sm:$0xff]
        %v1756 = vld [vmem:[%s746] sm:$0x1]
        %v1758 = vperm.slane %v1756, 0
        %1760 = vmatpush.msra.mxu0 %v1755
        %1761 = vmatpush.msra.mxu0 %v1754
        %1762 = vmatpush.msra.mxu0 %v1753
        %1763 = vmatpush.msra.mxu0 %v1752
        %1764 = vmatpush.msra.mxu0 %v1751
        %1765 = vmatpush.msra.mxu0 %v1750
        %1766 = vmatpush.msra.mxu0 %v1749
        %1767 = vmatpush.msra.mxu0 %v1748
        %1768 = vmatpush.msra.mxu0 %v1747
        %1769 = vmatpush.msra.mxu0 %v1746
        %1770 = vmatpush.msra.mxu0 %v1745
        %1771 = vmatpush.msra.mxu0 %v1744
        %1772 = vmatpush.msra.mxu0 %v1743
        %1773 = vmatpush.msra.mxu0 %v1742
        %1774 = vmatpush.msra.mxu0 %v1741
        %1775 = vmatpush.msra.mxu0 %v1740
        %1776 = vmatmul.f32.gmra.mxu0 %v1737
        %v1777 = vpop.f32.mrf.mxu0
        %v1778 = vadd.f32 %v1758, %v1777
        %1779 = vmatmul.f32.gmra.mxu0 %v1738
        %v1780 = vpop.f32.mrf.mxu0
        %v1781 = vadd.f32 %v1758, %v1780
        %1782 = vmatmul.f32.gmra.mxu0 %v1739
        %v1783 = vpop.f32.mrf.mxu0
        %v1784 = vadd.f32 %v1758, %v1783
        %1785 = vdwg.mxu0
        %v1786 = vadd.f32 %v1778, %v1034
        %v1787 = vadd.f32 %v1781, %v1035
        %v1788 = vadd.f32 %v1784, %v1036
        %v1789 = vld [vmem:[%s751] sm:$0xff]
        %v1790 = vld [vmem:[%s751 + $0x8] sm:$0xff]
        %v1791 = vld [vmem:[%s751 + $0x10] sm:$0xff]
        %v1792 = vld [vmem:[%s751 + $0x18] sm:$0xff]
        %v1793 = vld [vmem:[%s751 + $0x20] sm:$0xff]
        %v1794 = vld [vmem:[%s751 + $0x28] sm:$0xff]
        %v1795 = vld [vmem:[%s751 + $0x30] sm:$0xff]
        %v1796 = vld [vmem:[%s751 + $0x38] sm:$0xff]
        %v1797 = vld [vmem:[%s751 + $0x40] sm:$0xff]
        %v1798 = vld [vmem:[%s751 + $0x48] sm:$0xff]
        %v1799 = vld [vmem:[%s751 + $0x50] sm:$0xff]
        %v1800 = vld [vmem:[%s751 + $0x58] sm:$0xff]
        %v1801 = vld [vmem:[%s751 + $0x60] sm:$0xff]
        %v1802 = vld [vmem:[%s751 + $0x68] sm:$0xff]
        %v1803 = vld [vmem:[%s751 + $0x70] sm:$0xff]
        %v1804 = vld [vmem:[%s751 + $0x78] sm:$0xff]
        %v1805 = vld [vmem:[%s751 + $0x80] sm:$0xff]
        %v1806 = vld [vmem:[%s751 + $0x88] sm:$0xff]
        %v1807 = vld [vmem:[%s751 + $0x90] sm:$0xff]
        %v1808 = vld [vmem:[%s751 + $0x98] sm:$0xff]
        %v1809 = vld [vmem:[%s751 + $0xa0] sm:$0xff]
        %v1810 = vld [vmem:[%s751 + $0xa8] sm:$0xff]
        %v1811 = vld [vmem:[%s751 + $0xb0] sm:$0xff]
        %v1812 = vld [vmem:[%s751 + $0xb8] sm:$0xff]
        %v1813 = vld [vmem:[%s751 + $0xc0] sm:$0xff]
        %v1814 = vld [vmem:[%s751 + $0xc8] sm:$0xff]
        %v1815 = vld [vmem:[%s751 + $0xd0] sm:$0xff]
        %v1816 = vld [vmem:[%s751 + $0xd8] sm:$0xff]
        %v1817 = vld [vmem:[%s751 + $0xe0] sm:$0xff]
        %v1818 = vld [vmem:[%s751 + $0xe8] sm:$0xff]
        %v1819 = vld [vmem:[%s751 + $0xf0] sm:$0xff]
        %v1820 = vld [vmem:[%s751 + $0xf8] sm:$0xff]
        %v1821 = vld [vmem:[%s755] sm:$0x3]
        %v1823 = vperm.slane %v1821, 0
        %v1824 = vperm.slane %v1821, 1
        %1827 = vmatpush.msra.mxu0 %v1819
        %1828 = vmatpush.msra.mxu0 %v1817
        %1829 = vmatpush.msra.mxu0 %v1815
        %1830 = vmatpush.msra.mxu0 %v1813
        %1831 = vmatpush.msra.mxu0 %v1811
        %1832 = vmatpush.msra.mxu0 %v1809
        %1833 = vmatpush.msra.mxu0 %v1807
        %1834 = vmatpush.msra.mxu0 %v1805
        %1835 = vmatpush.msra.mxu0 %v1803
        %1836 = vmatpush.msra.mxu0 %v1801
        %1837 = vmatpush.msra.mxu0 %v1799
        %1838 = vmatpush.msra.mxu0 %v1797
        %1839 = vmatpush.msra.mxu0 %v1795
        %1840 = vmatpush.msra.mxu0 %v1793
        %1841 = vmatpush.msra.mxu0 %v1791
        %1842 = vmatpush.msra.mxu0 %v1789
        %1843 = vmatmul.f32.gmra.mxu0 %v1786
        %v1844 = vpop.f32.mrf.mxu0
        %v1845 = vadd.f32 %v1823, %v1844
        %1846 = vmatmul.f32.gmra.mxu0 %v1787
        %v1847 = vpop.f32.mrf.mxu0
        %v1848 = vadd.f32 %v1823, %v1847
        %1849 = vmatmul.f32.gmra.mxu0 %v1788
        %v1850 = vpop.f32.mrf.mxu0
        %v1851 = vadd.f32 %v1823, %v1850
        %1852 = vdwg.mxu0
        %1853 = vmatpush.msra.mxu0 %v1820
        %1854 = vmatpush.msra.mxu0 %v1818
        %1855 = vmatpush.msra.mxu0 %v1816
        %1856 = vmatpush.msra.mxu0 %v1814
        %1857 = vmatpush.msra.mxu0 %v1812
        %1858 = vmatpush.msra.mxu0 %v1810
        %1859 = vmatpush.msra.mxu0 %v1808
        %1860 = vmatpush.msra.mxu0 %v1806
        %1861 = vmatpush.msra.mxu0 %v1804
        %1862 = vmatpush.msra.mxu0 %v1802
        %1863 = vmatpush.msra.mxu0 %v1800
        %1864 = vmatpush.msra.mxu0 %v1798
        %1865 = vmatpush.msra.mxu0 %v1796
        %1866 = vmatpush.msra.mxu0 %v1794
        %1867 = vmatpush.msra.mxu0 %v1792
        %1868 = vmatpush.msra.mxu0 %v1790
        %1869 = vmatmul.f32.gmra.mxu0 %v1786
        %v1870 = vpop.f32.mrf.mxu0
        %v1871 = vadd.f32 %v1824, %v1870
        %1872 = vmatmul.f32.gmra.mxu0 %v1787
        %v1873 = vpop.f32.mrf.mxu0
        %v1874 = vadd.f32 %v1824, %v1873
        %1875 = vmatmul.f32.gmra.mxu0 %v1788
        %v1876 = vpop.f32.mrf.mxu0
        %v1877 = vadd.f32 %v1824, %v1876
        %1878 = vdwg.mxu0
        %v1879 = vmul.f32 %v1845, 0.5
        %v1880 = vmul.f32 %v1871, 0.5
        %v1881 = vmul.f32 %v1848, 0.5
        %v1882 = vmul.f32 %v1874, 0.5
        %v1883 = vmul.f32 %v1851, 0.5
        %v1884 = vmul.f32 %v1877, 0.5
        %v1885 = vmul.f32 %v1845, 0.044715
        %v1886 = vmul.f32 %v1871, 0.044715
        %v1887 = vmul.f32 %v1848, 0.044715
        %v1888 = vmul.f32 %v1874, 0.044715
        %v1889 = vmul.f32 %v1851, 0.044715
        %v1890 = vmul.f32 %v1877, 0.044715
        %v1891 = vmul.f32 %v1885, %v1845
        %v1892 = vmul.f32 %v1886, %v1871
        %v1893 = vmul.f32 %v1887, %v1848
        %v1894 = vmul.f32 %v1888, %v1874
        %v1895 = vmul.f32 %v1889, %v1851
        %v1896 = vmul.f32 %v1890, %v1877
        %v1897 = vmul.f32 %v1891, %v1845
        %v1898 = vmul.f32 %v1892, %v1871
        %v1899 = vmul.f32 %v1893, %v1848
        %v1900 = vmul.f32 %v1894, %v1874
        %v1901 = vmul.f32 %v1895, %v1851
        %v1902 = vmul.f32 %v1896, %v1877
        %v1903 = vadd.f32 %v1845, %v1897
        %v1904 = vadd.f32 %v1871, %v1898
        %v1905 = vadd.f32 %v1848, %v1899
        %v1906 = vadd.f32 %v1874, %v1900
        %v1907 = vadd.f32 %v1851, %v1901
        %v1908 = vadd.f32 %v1877, %v1902
        %v1909 = vmul.f32 %v1903, 0.7978846
        %v1910 = vmul.f32 %v1904, 0.7978846
        %v1911 = vmul.f32 %v1905, 0.7978846
        %v1912 = vmul.f32 %v1906, 0.7978846
        %v1913 = vmul.f32 %v1907, 0.7978846
        %v1914 = vmul.f32 %v1908, 0.7978846
        %v1915 = vtanh.pop %v1909
        %v1916 = vtanh.pop %v1910
        %v1917 = vtanh.pop %v1911
        %v1918 = vtanh.pop %v1912
        %v1919 = vtanh.pop %v1913
        %v1920 = vtanh.pop %v1914
        %v1921 = vadd.f32 %v1915, 1.0
        %v1922 = vadd.f32 %v1916, 1.0
        %v1923 = vadd.f32 %v1917, 1.0
        %v1924 = vadd.f32 %v1918, 1.0
        %v1925 = vadd.f32 %v1919, 1.0
        %v1926 = vadd.f32 %v1920, 1.0
        %v1927 = vmul.f32 %v1879, %v1921
        %v1928 = vmul.f32 %v1880, %v1922
        %v1929 = vmul.f32 %v1881, %v1923
        %v1930 = vmul.f32 %v1882, %v1924
        %v1931 = vmul.f32 %v1883, %v1925
        %v1932 = vmul.f32 %v1884, %v1926
        %v1933 = vld [vmem:[%s760] sm:$0xff]
        %v1934 = vld [vmem:[%s760 + $0x8] sm:$0xff]
        %v1935 = vld [vmem:[%s760 + $0x10] sm:$0xff]
        %v1936 = vld [vmem:[%s760 + $0x18] sm:$0xff]
        %v1937 = vld [vmem:[%s760 + $0x20] sm:$0xff]
        %v1938 = vld [vmem:[%s760 + $0x28] sm:$0xff]
        %v1939 = vld [vmem:[%s760 + $0x30] sm:$0xff]
        %v1940 = vld [vmem:[%s760 + $0x38] sm:$0xff]
        %v1941 = vld [vmem:[%s760 + $0x40] sm:$0xff]
        %v1942 = vld [vmem:[%s760 + $0x48] sm:$0xff]
        %v1943 = vld [vmem:[%s760 + $0x50] sm:$0xff]
        %v1944 = vld [vmem:[%s760 + $0x58] sm:$0xff]
        %v1945 = vld [vmem:[%s760 + $0x60] sm:$0xff]
        %v1946 = vld [vmem:[%s760 + $0x68] sm:$0xff]
        %v1947 = vld [vmem:[%s760 + $0x70] sm:$0xff]
        %v1948 = vld [vmem:[%s760 + $0x78] sm:$0xff]
        %v1949 = vld [vmem:[%s760 + $0x80] sm:$0xff]
        %v1950 = vld [vmem:[%s760 + $0x88] sm:$0xff]
        %v1951 = vld [vmem:[%s760 + $0x90] sm:$0xff]
        %v1952 = vld [vmem:[%s760 + $0x98] sm:$0xff]
        %v1953 = vld [vmem:[%s760 + $0xa0] sm:$0xff]
        %v1954 = vld [vmem:[%s760 + $0xa8] sm:$0xff]
        %v1955 = vld [vmem:[%s760 + $0xb0] sm:$0xff]
        %v1956 = vld [vmem:[%s760 + $0xb8] sm:$0xff]
        %v1957 = vld [vmem:[%s760 + $0xc0] sm:$0xff]
        %v1958 = vld [vmem:[%s760 + $0xc8] sm:$0xff]
        %v1959 = vld [vmem:[%s760 + $0xd0] sm:$0xff]
        %v1960 = vld [vmem:[%s760 + $0xd8] sm:$0xff]
        %v1961 = vld [vmem:[%s760 + $0xe0] sm:$0xff]
        %v1962 = vld [vmem:[%s760 + $0xe8] sm:$0xff]
        %v1963 = vld [vmem:[%s760 + $0xf0] sm:$0xff]
        %v1964 = vld [vmem:[%s760 + $0xf8] sm:$0xff]
        %v1965 = vld [vmem:[%s763] sm:$0x1]
        %v1967 = vperm.slane %v1965, 0
        %1969 = vmatpush.msra.mxu0 %v1948
        %1970 = vmatpush.msra.mxu0 %v1947
        %1971 = vmatpush.msra.mxu0 %v1946
        %1972 = vmatpush.msra.mxu0 %v1945
        %1973 = vmatpush.msra.mxu0 %v1944
        %1974 = vmatpush.msra.mxu0 %v1943
        %1975 = vmatpush.msra.mxu0 %v1942
        %1976 = vmatpush.msra.mxu0 %v1941
        %1977 = vmatpush.msra.mxu0 %v1940
        %1978 = vmatpush.msra.mxu0 %v1939
        %1979 = vmatpush.msra.mxu0 %v1938
        %1980 = vmatpush.msra.mxu0 %v1937
        %1981 = vmatpush.msra.mxu0 %v1936
        %1982 = vmatpush.msra.mxu0 %v1935
        %1983 = vmatpush.msra.mxu0 %v1934
        %1984 = vmatpush.msra.mxu0 %v1933
        %1985 = vmatmul.f32.gmra.mxu0 %v1927
        %v1986 = vpop.f32.mrf.mxu0
        %v1987 = vadd.f32 %v1967, %v1986
        %1988 = vmatmul.f32.gmra.mxu0 %v1929
        %v1989 = vpop.f32.mrf.mxu0
        %v1990 = vadd.f32 %v1967, %v1989
        %1991 = vmatmul.f32.gmra.mxu0 %v1931
        %v1992 = vpop.f32.mrf.mxu0
        %v1993 = vadd.f32 %v1967, %v1992
        %1994 = vdwg.mxu0
        %1995 = vmatpush.msra.mxu0 %v1964
        %1996 = vmatpush.msra.mxu0 %v1963
        %1997 = vmatpush.msra.mxu0 %v1962
        %1998 = vmatpush.msra.mxu0 %v1961
        %1999 = vmatpush.msra.mxu0 %v1960
        %2000 = vmatpush.msra.mxu0 %v1959
        %2001 = vmatpush.msra.mxu0 %v1958
        %2002 = vmatpush.msra.mxu0 %v1957
        %2003 = vmatpush.msra.mxu0 %v1956
        %2004 = vmatpush.msra.mxu0 %v1955
        %2005 = vmatpush.msra.mxu0 %v1954
        %2006 = vmatpush.msra.mxu0 %v1953
        %2007 = vmatpush.msra.mxu0 %v1952
        %2008 = vmatpush.msra.mxu0 %v1951
        %2009 = vmatpush.msra.mxu0 %v1950
        %2010 = vmatpush.msra.mxu0 %v1949
        %2011 = vmatmul.f32.gmra.mxu0 %v1928
        %v2012 = vpop.f32.mrf.mxu0
        %v2013 = vadd.f32 %v1987, %v2012
        %2014 = vmatmul.f32.gmra.mxu0 %v1930
        %v2015 = vpop.f32.mrf.mxu0
        %v2016 = vadd.f32 %v1990, %v2015
        %2017 = vmatmul.f32.gmra.mxu0 %v1932
        %v2018 = vpop.f32.mrf.mxu0
        %v2019 = vadd.f32 %v1993, %v2018
        %2020 = vdwg.mxu0
        %v2021 = vadd.f32 %v2013, %v1786
        %v2022 = vadd.f32 %v2016, %v1787
        %v2023 = vadd.f32 %v2019, %v1788
        %2024 = vst [vmem:[#allocation2] sm:$0xff] %v2021
        %2025 = vst [vmem:[#allocation2 + $0x8] sm:$0xff] %v2022
        %2026 = vst [vmem:[#allocation2 + $0x10] sm:$0xff] %v2023
        %p2027 = scmp.eq.s32.totalorder %s39, 1
        // Predicated region
        $region105: #{vit_forward.1} parent=99 // pred_check
          %p2028 = pneg %p2027
        $region106: #{vit_forward.1} parent=99 // pred_check_branch
          %2030 = sbr.rel (%p2028) target = $region108
        $region107: #{vit_forward.1} parent=99 // pred_region
          %v2031 = vld [vmem:[#allocation2] sm:$0x1]
          %v2032 = vld [vmem:[%s16] sm:$0x1]
          %v2033 = vld [vmem:[%s17] sm:$0x1]
          %vm2034 = vcmask 1040384
          %v2035 = vsel %vm2034, %v2031, 0.0
          %2036 = vadd.xlane.f32.xlu0 %v2035
          %v2037 = vpop.xlane.xlu0 %2036
          %v2038 = vmul.f32 %v2037, %v970
          %v2039 = vsub.f32 %v2031, %v2038
          %v2040 = vmul.f32 %v2039, %v2039
          %v2041 = vsel %vm2034, %v2040, 0.0
          %2042 = vadd.xlane.f32.xlu0 %v2041
          %v2043 = vpop.xlane.xlu0 %2042
          %v2044 = vmul.f32 %v2043, %v970
          %v2045 = vadd.f32 %v2044, 1e-05
          %v2046 = vrsqrt.pop %v2045
          %v2047 = vmul.f32 %v2046, %v2045
          %v2048 = vmul.f32 %v2047, %v2046
          %v2049 = vmul.f32 0.5, %v2048
          %v2050 = vsub.f32 1.5, %v2049
          %v2051 = vmul.f32 %v2046, %v2050
          %vm2052 = vweird.f32 %v2045
          %vm2053 = vweird.f32 %v2046
          %vm2054 = vmor %vm2052, %vm2053
          %v2055 = vsel %vm2054, %v2046, %v2051
          %v2056 = vmul.f32 %v2039, %v2055
          %v2057 = vmul.f32 %v2056, %v2032
          %v2058 = vadd.f32 %v2057, %v2033
          %v2059 = vld [vmem:[%s18] sm:$0xff]
          %v2060 = vld [vmem:[%s18 + $0x8] sm:$0xff]
          %v2061 = vld [vmem:[%s18 + $0x10] sm:$0xff]
          %v2062 = vld [vmem:[%s18 + $0x18] sm:$0xff]
          %v2063 = vld [vmem:[%s18 + $0x20] sm:$0xff]
          %v2064 = vld [vmem:[%s18 + $0x28] sm:$0xff]
          %v2065 = vld [vmem:[%s18 + $0x30] sm:$0xff]
          %v2066 = vld [vmem:[%s18 + $0x38] sm:$0xff]
          %v2067 = vld [vmem:[%s18 + $0x40] sm:$0xff]
          %v2068 = vld [vmem:[%s18 + $0x48] sm:$0xff]
          %v2069 = vld [vmem:[%s18 + $0x50] sm:$0xff]
          %v2070 = vld [vmem:[%s18 + $0x58] sm:$0xff]
          %v2071 = vld [vmem:[%s18 + $0x60] sm:$0xff]
          %v2072 = vld [vmem:[%s18 + $0x68] sm:$0xff]
          %v2073 = vld [vmem:[%s18 + $0x70] sm:$0xff]
          %v2074 = vld [vmem:[%s18 + $0x78] sm:$0xff]
          %v2075 = vld [vmem:[%s19] sm:$0x1]
          %2076 = vmatpush.msra.mxu0 %v2074
          %2077 = vmatpush.msra.mxu0 %v2073
          %2078 = vmatpush.msra.mxu0 %v2072
          %2079 = vmatpush.msra.mxu0 %v2071
          %2080 = vmatpush.msra.mxu0 %v2070
          %2081 = vmatpush.msra.mxu0 %v2069
          %2082 = vmatpush.msra.mxu0 %v2068
          %2083 = vmatpush.msra.mxu0 %v2067
          %2084 = vmatpush.msra.mxu0 %v2066
          %2085 = vmatpush.msra.mxu0 %v2065
          %2086 = vmatpush.msra.mxu0 %v2064
          %2087 = vmatpush.msra.mxu0 %v2063
          %2088 = vmatpush.msra.mxu0 %v2062
          %2089 = vmatpush.msra.mxu0 %v2061
          %2090 = vmatpush.msra.mxu0 %v2060
          %2091 = vmatpush.msra.mxu0 %v2059
          %2092 = vmatmul.f32.gmra.mxu0 %v2058
          %v2093 = vpop.f32.mrf.mxu0
          %v2094 = vadd.f32 %v2075, %v2093
          %2095 = vdwg.mxu0
          %vm2096 = vcmask 73728
          %2097 = vst.msk [vmem:[%s728] sm:$0x1] %vm2096, %v2094
        $region108: #{vit_forward.1} parent=99 // pred_fallthru
          _
        %s2098 = sand.u32 %s514, 1
        %s2099 = scalar_lea.sflag [#allocation5], %s2098
        %s2100 = sand.u32 %s514, 1
        %s2101 = scalar_lea.vmem [#allocation4], %s2100
        // Predicated region
        $region109: #{vit_forward.1} parent=99 // pred_check
          %p2102 = pneg %p524
        $region110: #{vit_forward.1} parent=99 // pred_check_branch
          %2104 = sbr.rel (%p2102) target = $region112
        $region111: #{vit_forward.1} parent=99 // pred_region
          %2106 = vsyncadd %s2099, 0
          %s2107 = scalar_lea.hbm %s20, %s38
          %s2109 = sshll.u32 %s2101, 4
          %s2110 = int_to_ptr.vmem [resolvable:$true] %s2109
          %s2111 = sshll.u32 %s2107, 4
          %s2112 = int_to_ptr.hbm [resolvable:$true] %s2111
          %2114 = dma.vmem_to_hbm [thread:$0]  %s2110, 16, %s2112, %s2099
        $region112: #{vit_forward.1} parent=99 // pred_fallthru
          _
      $region100: #{vit_forward.1} parent=5 // pred_fallthru
        _
      %p2115 = scmp.le.s32.totalorder 2, %s29
      // Predicated region
      $region113: #{vit_forward.1} parent=5 // pred_check
        %p2116 = pneg %p2115
      $region114: #{vit_forward.1} parent=5 // pred_check_branch
        %2118 = sbr.rel (%p2116) target = $region116
      $region115: #{vit_forward.1} parent=5 // pred_region
        %s2119 = ssub.s32 %s29, 2
        // Predicated region
        $region117: #{vit_forward.1} parent=115 // pred_check
          %p2120 = pneg %p530
        $region118: #{vit_forward.1} parent=115 // pred_check_branch
          %2122 = sbr.rel (%p2120) target = $region120
        $region119: #{vit_forward.1} parent=115 // pred_region
          %s2123 = sand.u32 %s515, 1
          %s2124 = scalar_lea.sflag [#allocation5], %s2123
          %s2125 = sand.u32 %s515, 1
          %s2126 = scalar_lea.vmem [#allocation4], %s2125
          %2128 = dma.done %s2124, 16
        $region120: #{vit_forward.1} parent=115 // pred_fallthru
          _
      $region116: #{vit_forward.1} parent=5 // pred_fallthru
        _
    $region6: #{vit_forward.1} parent=1 // loop_footer
      %s33 = sadd.s32 1, %s29
    $region7: #{vit_forward.1} parent=1 // loop_footer_branch
      %28 = sbr.rel target = $region3
    $region8: #{vit_forward.1} parent=1 // loop_exit
      _
    %2129 = vsyncpa [#allocation5], 1
    %s2130 = scalar_lea.sflag [#allocation5], 1
    %2131 = vsyncpa %s2130, 1

</llo_original>
